<compile_context>
chip_gen: v7x
topology: tpu7x:2x2x1
jax: 0.10.0
libtpu: 0.0.40
codegen_flags: <defaults>
</compile_context>

<pallas_src>
import jax
import jax.numpy as jnp
from jax.experimental import pallas as pl
from jax.experimental.pallas import tpu as pltpu


P_PAD = 256                 # 14*14 = 196 spatial positions, padded to 2*128 lanes
C_MID = 10                  # convT1 output channels
N_FUSED = C_MID * P_PAD     # 2560 lane-dense fused matmul width (20 vregs/row)


# ----------------------------------------------------------------------------
# Fused Pallas kernel: relu(convT2(relu(convT1(linear1(x)))))
# ----------------------------------------------------------------------------
def _generator_kernel(x_ref, wA_ref, bA_ref, w2_ref, b2_ref, out_ref):
    """x_ref  : (B, L)      VMEM
       wA_ref : (L, 2560)   VMEM   folded linear1∘convT1 weight, cols = (co, p)
       bA_ref : (1, 2560)   VMEM   folded bias (zero in the padded lanes)
       w2_ref : (10, 4)     SMEM   convT2 weight, cols = ki*2+kj
       b2_ref : (1,)        SMEM   convT2 bias
       out_ref: (B, 1024)   VMEM   out[b, (ki*2+kj)*256 + p], p = oi*14+oj
    """
    B = x_ref.shape[0]

    # Stage A (MXU): fused linear1 + convT1, bias, ReLU.  Lane-dense N=2560.
    h = jnp.dot(x_ref[...], wA_ref[...], preferred_element_type=jnp.float32)
    h = jnp.maximum(h + bA_ref[...], 0.0)                      # (B, 2560)

    # Stage B (VPU): convT2 as 10x4 scalar-broadcast FMAs on 128-aligned chunks.
    b2 = b2_ref[0]
    accs = [jnp.zeros((B, P_PAD), jnp.float32) for _ in range(4)]
    for c in range(C_MID):
        chunk = h[:, c * P_PAD:(c + 1) * P_PAD]                # lane-aligned slice
        for kk in range(4):
            accs[kk] = accs[kk] + w2_ref[c, kk] * chunk
    for kk in range(4):                                        # lane-aligned stores
        out_ref[:, kk * P_PAD:(kk + 1) * P_PAD] = jnp.maximum(accs[kk] + b2, 0.0)


def generator_forward(x, kparams):
    """x: (B, latent) f32, kparams from prepare_params -> (B, 1, 28, 28) f32."""
    B = x.shape[0]
    z = pl.pallas_call(
        _generator_kernel,
        out_shape=jax.ShapeDtypeStruct((B, 4 * P_PAD), jnp.float32),
        in_specs=[
            pl.BlockSpec(memory_space=pltpu.MemorySpace.VMEM),   # x
            pl.BlockSpec(memory_space=pltpu.MemorySpace.VMEM),   # wA (327 KB)
            pl.BlockSpec(memory_space=pltpu.MemorySpace.VMEM),   # bA
            pl.BlockSpec(memory_space=pltpu.MemorySpace.SMEM),   # w2 scalars
            pl.BlockSpec(memory_space=pltpu.MemorySpace.SMEM),   # b2 scalar
        ],
        out_specs=pl.BlockSpec(memory_space=pltpu.MemorySpace.VMEM),
        # TODO(synk): for large batch, tile rows with grid=(B//tm,) and
        # dimension_semantics=("parallel",) to use v7x's second TensorCore.
    )(x, kparams["wA"], kparams["bA"], kparams["w2"], kparams["b2"])

    # Final 2x2 sub-pixel interleave to NCHW -- 3136 elements, one tiny XLA op.
    z = z.reshape(B, 2, 2, P_PAD)[:, :, :, :196]          # (b, ki, kj, p)
    z = z.reshape(B, 2, 2, 14, 14)                        # (b, ki, kj, oi, oj)
    z = jnp.transpose(z, (0, 3, 1, 4, 2)).reshape(B, 1, 28, 28)
    return z


# ----------------------------------------------------------------------------
# One-time (offline) parameter preparation
# ----------------------------------------------------------------------------
def prepare_params(params):
    """Fold linear1∘convT1, permute/pad to kernel layout, flatten convT2."""
    L = params["w1"].shape[0]
    w1 = params["w1"].reshape(L, 64, 7, 7)        # cols of w1 are (c, i, j)
    b1 = params["b1"].reshape(64, 7, 7)
    wc1, bc1 = params["conv1_w"], params["conv1_b"]   # (64,10,2,2), (10,)
    wc2, bc2 = params["conv2_w"], params["conv2_b"]   # (10,1,2,2), (1,)

    hi = jax.lax.Precision.HIGHEST
    # a[co, 2i+ki, 2j+kj] = sum_c (x.w1[:,c,i,j] + b1[c,i,j]) * wc1[c,co,ki,kj] + bc1[co]
    wA = jnp.einsum("lcij,cokp->loikjp", w1, wc1, precision=hi).reshape(L, 10, 14, 14)
    bA = (jnp.einsum("cij,cokp->oikjp", b1, wc1, precision=hi).reshape(10, 14, 14)
          + bc1[:, None, None])

    # Pad spatial 196 -> 256 so every per-channel chunk is exactly 2 full vregs.
    wA_p = jnp.zeros((L, C_MID, P_PAD), jnp.float32).at[:, :, :196].set(
        wA.reshape(L, C_MID, 196))
    bA_p = jnp.zeros((C_MID, P_PAD), jnp.float32).at[:, :196].set(
        bA.reshape(C_MID, 196))

    return {
        "wA": wA_p.reshape(L, N_FUSED),
        "bA": bA_p.reshape(1, N_FUSED),
        "w2": wc2.reshape(10, 4),          # cols ordered ki*2+kj
        "b2": bc2.reshape(1),
    }


# ----------------------------------------------------------------------------
# Pure-JAX reference mirroring the PyTorch module op-by-op
# ----------------------------------------------------------------------------
def generator_reference(x, params):
    hi = jax.lax.Precision.HIGHEST
    B = x.shape[0]
    h = jnp.dot(x, params["w1"], precision=hi) + params["b1"]       # Linear
    h = h.reshape(B, 64, 7, 7)                                      # view(-1,64,7,7)
    # ConvTranspose2d(k=2, stride=2, no padding) has non-overlapping taps:
    # out[b,co,2i+ki,2j+kj] = sum_c in[b,c,i,j] * W[c,co,ki,kj] + bias[co]
    y = jnp.einsum("bcij,cokp->boikjp", h, params["conv1_w"],
                   precision=hi).reshape(B, 10, 14, 14)
    y = jax.nn.relu(y + params["conv1_b"][None, :, None, None])
    z = jnp.einsum("bcij,cokp->boikjp", y, params["conv2_w"],
                   precision=hi).reshape(B, 1, 28, 28)
    z = jax.nn.relu(z + params["conv2_b"][None, :, None, None])
    return z


# ----------------------------------------------------------------------------
# Deterministic parameter init (shapes match the PyTorch module __init__)
# ----------------------------------------------------------------------------
def init_params(key, latent_dims):
    k1, k2, k3, k4, k5, k6 = jax.random.split(key, 6)
    scale = 0.05
    return {
        # nn.Linear(latent, 3136): stored already transposed as (L, 3136),
        # columns ordered (c, i, j) exactly as .view(-1, 64, 7, 7) expects.
        "w1": scale * jax.random.normal(k1, (latent_dims, 7 * 7 * 64), jnp.float32),
        "b1": scale * jax.random.normal(k2, (7 * 7 * 64,), jnp.float32),
        # nn.ConvTranspose2d(64, 10, 2, stride=2): weight (in, out, kh, kw)
        "conv1_w": scale * jax.random.normal(k3, (64, 10, 2, 2), jnp.float32),
        "conv1_b": scale * jax.random.normal(k4, (10,), jnp.float32),
        # nn.ConvTranspose2d(10, 1, 2, stride=2)
        "conv2_w": scale * jax.random.normal(k5, (10, 1, 2, 2), jnp.float32),
        "conv2_b": scale * jax.random.normal(k6, (1,), jnp.float32),
    }


if __name__ == "__main__":
    latent_dims = 32
    batch = 2

    key = jax.random.PRNGKey(0)
    pkey, xkey = jax.random.split(key)
    params = init_params(pkey, latent_dims)
    kparams = prepare_params(params)          # offline, once
    x = jax.random.normal(xkey, (batch, latent_dims), jnp.float32)

    out = jax.jit(generator_forward)(x, kparams)
    out = jax.block_until_ready(out)

    assert out.shape == (batch, 1, 28, 28), out.shape
    assert out.dtype == jnp.float32
    assert bool(jnp.all(jnp.isfinite(out)))
    assert bool(jnp.all(out >= 0.0))          # final ReLU

    ref = generator_reference(x, params)
    err = float(jnp.max(jnp.abs(out - ref)))
    assert bool(jnp.allclose(out, ref, atol=1e-2, rtol=1e-2)), err

    print("KERNEL_OK")
</pallas_src>

<mosaic_0001>
module attributes {stable_mosaic.version = 11 : i64} {
  func.func @_generator_kernel(%arg0: memref<2x32xf32, #tpu.memory_space<vmem>>, %arg1: memref<32x2560xf32, #tpu.memory_space<vmem>>, %arg2: memref<1x2560xf32, #tpu.memory_space<vmem>>, %arg3: memref<10x4xf32, #tpu.memory_space<smem>>, %arg4: memref<1xf32, #tpu.memory_space<smem>>, %arg5: memref<2x1024xf32, #tpu.memory_space<vmem>>) attributes {dimension_semantics = [], scalar_prefetch = 0 : i64, scratch_operands = 0 : i64, tpu.core_type = #tpu.core_type<tc>} {
    %c0 = arith.constant 0 : index
    %c0_0 = arith.constant 0 : index
    %0 = vector.load %arg0[%c0, %c0_0] : memref<2x32xf32, #tpu.memory_space<vmem>>, vector<2x32xf32>
    %c0_1 = arith.constant 0 : index
    %c0_2 = arith.constant 0 : index
    %1 = vector.load %arg1[%c0_1, %c0_2] : memref<32x2560xf32, #tpu.memory_space<vmem>>, vector<32x2560xf32>
    %cst = arith.constant dense<0.000000e+00> : vector<2x2560xf32>
    %2 = tpu.matmul %0, %1, %cst {dimension_numbers = #tpu.dot_dimension_numbers<[1], [0], [0], [1], [0, 0, 1, 1], [], []>} : vector<2x32xf32>, vector<32x2560xf32>, vector<2x2560xf32> -> vector<2x2560xf32>
    %c0_3 = arith.constant 0 : index
    %c0_4 = arith.constant 0 : index
    %3 = vector.load %arg2[%c0_3, %c0_4] : memref<1x2560xf32, #tpu.memory_space<vmem>>, vector<1x2560xf32>
    %4 = vector.broadcast %3 : vector<1x2560xf32> to vector<2x2560xf32>
    %5 = arith.addf %2, %4 : vector<2x2560xf32>
    %cst_5 = arith.constant 0.000000e+00 : f32
    %6 = vector.broadcast %cst_5 : f32 to vector<2x2560xf32>
    %7 = arith.maximumf %5, %6 : vector<2x2560xf32>
    %c0_6 = arith.constant 0 : index
    %8 = memref.load %arg4[%c0_6] : memref<1xf32, #tpu.memory_space<smem>>
    %cst_7 = arith.constant 0.000000e+00 : f32
    %9 = vector.broadcast %cst_7 : f32 to vector<2x256xf32>
    %cst_8 = arith.constant 0.000000e+00 : f32
    %10 = vector.broadcast %cst_8 : f32 to vector<2x256xf32>
    %cst_9 = arith.constant 0.000000e+00 : f32
    %11 = vector.broadcast %cst_9 : f32 to vector<2x256xf32>
    %cst_10 = arith.constant 0.000000e+00 : f32
    %12 = vector.broadcast %cst_10 : f32 to vector<2x256xf32>
    %13 = vector.extract_strided_slice %7 {offsets = [0, 0], sizes = [2, 256], strides = [1, 1]} : vector<2x2560xf32> to vector<2x256xf32>
    %c0_11 = arith.constant 0 : index
    %c0_12 = arith.constant 0 : index
    %14 = memref.load %arg3[%c0_11, %c0_12] : memref<10x4xf32, #tpu.memory_space<smem>>
    %15 = vector.broadcast %14 : f32 to vector<2x256xf32>
    %16 = arith.mulf %15, %13 : vector<2x256xf32>
    %17 = arith.addf %9, %16 : vector<2x256xf32>
    %c0_13 = arith.constant 0 : index
    %c1 = arith.constant 1 : index
    %18 = memref.load %arg3[%c0_13, %c1] : memref<10x4xf32, #tpu.memory_space<smem>>
    %19 = vector.broadcast %18 : f32 to vector<2x256xf32>
    %20 = arith.mulf %19, %13 : vector<2x256xf32>
    %21 = arith.addf %10, %20 : vector<2x256xf32>
    %c0_14 = arith.constant 0 : index
    %c2 = arith.constant 2 : index
    %22 = memref.load %arg3[%c0_14, %c2] : memref<10x4xf32, #tpu.memory_space<smem>>
    %23 = vector.broadcast %22 : f32 to vector<2x256xf32>
    %24 = arith.mulf %23, %13 : vector<2x256xf32>
    %25 = arith.addf %11, %24 : vector<2x256xf32>
    %c0_15 = arith.constant 0 : index
    %c3 = arith.constant 3 : index
    %26 = memref.load %arg3[%c0_15, %c3] : memref<10x4xf32, #tpu.memory_space<smem>>
    %27 = vector.broadcast %26 : f32 to vector<2x256xf32>
    %28 = arith.mulf %27, %13 : vector<2x256xf32>
    %29 = arith.addf %12, %28 : vector<2x256xf32>
    %30 = vector.extract_strided_slice %7 {offsets = [0, 256], sizes = [2, 256], strides = [1, 1]} : vector<2x2560xf32> to vector<2x256xf32>
    %c1_16 = arith.constant 1 : index
    %c0_17 = arith.constant 0 : index
    %31 = memref.load %arg3[%c1_16, %c0_17] : memref<10x4xf32, #tpu.memory_space<smem>>
    %32 = vector.broadcast %31 : f32 to vector<2x256xf32>
    %33 = arith.mulf %32, %30 : vector<2x256xf32>
    %34 = arith.addf %17, %33 : vector<2x256xf32>
    %c1_18 = arith.constant 1 : index
    %c1_19 = arith.constant 1 : index
    %35 = memref.load %arg3[%c1_18, %c1_19] : memref<10x4xf32, #tpu.memory_space<smem>>
    %36 = vector.broadcast %35 : f32 to vector<2x256xf32>
    %37 = arith.mulf %36, %30 : vector<2x256xf32>
    %38 = arith.addf %21, %37 : vector<2x256xf32>
    %c1_20 = arith.constant 1 : index
    %c2_21 = arith.constant 2 : index
    %39 = memref.load %arg3[%c1_20, %c2_21] : memref<10x4xf32, #tpu.memory_space<smem>>
    %40 = vector.broadcast %39 : f32 to vector<2x256xf32>
    %41 = arith.mulf %40, %30 : vector<2x256xf32>
    %42 = arith.addf %25, %41 : vector<2x256xf32>
    %c1_22 = arith.constant 1 : index
    %c3_23 = arith.constant 3 : index
    %43 = memref.load %arg3[%c1_22, %c3_23] : memref<10x4xf32, #tpu.memory_space<smem>>
    %44 = vector.broadcast %43 : f32 to vector<2x256xf32>
    %45 = arith.mulf %44, %30 : vector<2x256xf32>
    %46 = arith.addf %29, %45 : vector<2x256xf32>
    %47 = vector.extract_strided_slice %7 {offsets = [0, 512], sizes = [2, 256], strides = [1, 1]} : vector<2x2560xf32> to vector<2x256xf32>
    %c2_24 = arith.constant 2 : index
    %c0_25 = arith.constant 0 : index
    %48 = memref.load %arg3[%c2_24, %c0_25] : memref<10x4xf32, #tpu.memory_space<smem>>
    %49 = vector.broadcast %48 : f32 to vector<2x256xf32>
    %50 = arith.mulf %49, %47 : vector<2x256xf32>
    %51 = arith.addf %34, %50 : vector<2x256xf32>
    %c2_26 = arith.constant 2 : index
    %c1_27 = arith.constant 1 : index
    %52 = memref.load %arg3[%c2_26, %c1_27] : memref<10x4xf32, #tpu.memory_space<smem>>
    %53 = vector.broadcast %52 : f32 to vector<2x256xf32>
    %54 = arith.mulf %53, %47 : vector<2x256xf32>
    %55 = arith.addf %38, %54 : vector<2x256xf32>
    %c2_28 = arith.constant 2 : index
    %c2_29 = arith.constant 2 : index
    %56 = memref.load %arg3[%c2_28, %c2_29] : memref<10x4xf32, #tpu.memory_space<smem>>
    %57 = vector.broadcast %56 : f32 to vector<2x256xf32>
    %58 = arith.mulf %57, %47 : vector<2x256xf32>
    %59 = arith.addf %42, %58 : vector<2x256xf32>
    %c2_30 = arith.constant 2 : index
    %c3_31 = arith.constant 3 : index
    %60 = memref.load %arg3[%c2_30, %c3_31] : memref<10x4xf32, #tpu.memory_space<smem>>
    %61 = vector.broadcast %60 : f32 to vector<2x256xf32>
    %62 = arith.mulf %61, %47 : vector<2x256xf32>
    %63 = arith.addf %46, %62 : vector<2x256xf32>
    %64 = vector.extract_strided_slice %7 {offsets = [0, 768], sizes = [2, 256], strides = [1, 1]} : vector<2x2560xf32> to vector<2x256xf32>
    %c3_32 = arith.constant 3 : index
    %c0_33 = arith.constant 0 : index
    %65 = memref.load %arg3[%c3_32, %c0_33] : memref<10x4xf32, #tpu.memory_space<smem>>
    %66 = vector.broadcast %65 : f32 to vector<2x256xf32>
    %67 = arith.mulf %66, %64 : vector<2x256xf32>
    %68 = arith.addf %51, %67 : vector<2x256xf32>
    %c3_34 = arith.constant 3 : index
    %c1_35 = arith.constant 1 : index
    %69 = memref.load %arg3[%c3_34, %c1_35] : memref<10x4xf32, #tpu.memory_space<smem>>
    %70 = vector.broadcast %69 : f32 to vector<2x256xf32>
    %71 = arith.mulf %70, %64 : vector<2x256xf32>
    %72 = arith.addf %55, %71 : vector<2x256xf32>
    %c3_36 = arith.constant 3 : index
    %c2_37 = arith.constant 2 : index
    %73 = memref.load %arg3[%c3_36, %c2_37] : memref<10x4xf32, #tpu.memory_space<smem>>
    %74 = vector.broadcast %73 : f32 to vector<2x256xf32>
    %75 = arith.mulf %74, %64 : vector<2x256xf32>
    %76 = arith.addf %59, %75 : vector<2x256xf32>
    %c3_38 = arith.constant 3 : index
    %c3_39 = arith.constant 3 : index
    %77 = memref.load %arg3[%c3_38, %c3_39] : memref<10x4xf32, #tpu.memory_space<smem>>
    %78 = vector.broadcast %77 : f32 to vector<2x256xf32>
    %79 = arith.mulf %78, %64 : vector<2x256xf32>
    %80 = arith.addf %63, %79 : vector<2x256xf32>
    %81 = vector.extract_strided_slice %7 {offsets = [0, 1024], sizes = [2, 256], strides = [1, 1]} : vector<2x2560xf32> to vector<2x256xf32>
    %c4 = arith.constant 4 : index
    %c0_40 = arith.constant 0 : index
    %82 = memref.load %arg3[%c4, %c0_40] : memref<10x4xf32, #tpu.memory_space<smem>>
    %83 = vector.broadcast %82 : f32 to vector<2x256xf32>
    %84 = arith.mulf %83, %81 : vector<2x256xf32>
    %85 = arith.addf %68, %84 : vector<2x256xf32>
    %c4_41 = arith.constant 4 : index
    %c1_42 = arith.constant 1 : index
    %86 = memref.load %arg3[%c4_41, %c1_42] : memref<10x4xf32, #tpu.memory_space<smem>>
    %87 = vector.broadcast %86 : f32 to vector<2x256xf32>
    %88 = arith.mulf %87, %81 : vector<2x256xf32>
    %89 = arith.addf %72, %88 : vector<2x256xf32>
    %c4_43 = arith.constant 4 : index
    %c2_44 = arith.constant 2 : index
    %90 = memref.load %arg3[%c4_43, %c2_44] : memref<10x4xf32, #tpu.memory_space<smem>>
    %91 = vector.broadcast %90 : f32 to vector<2x256xf32>
    %92 = arith.mulf %91, %81 : vector<2x256xf32>
    %93 = arith.addf %76, %92 : vector<2x256xf32>
    %c4_45 = arith.constant 4 : index
    %c3_46 = arith.constant 3 : index
    %94 = memref.load %arg3[%c4_45, %c3_46] : memref<10x4xf32, #tpu.memory_space<smem>>
    %95 = vector.broadcast %94 : f32 to vector<2x256xf32>
    %96 = arith.mulf %95, %81 : vector<2x256xf32>
    %97 = arith.addf %80, %96 : vector<2x256xf32>
    %98 = vector.extract_strided_slice %7 {offsets = [0, 1280], sizes = [2, 256], strides = [1, 1]} : vector<2x2560xf32> to vector<2x256xf32>
    %c5 = arith.constant 5 : index
    %c0_47 = arith.constant 0 : index
    %99 = memref.load %arg3[%c5, %c0_47] : memref<10x4xf32, #tpu.memory_space<smem>>
    %100 = vector.broadcast %99 : f32 to vector<2x256xf32>
    %101 = arith.mulf %100, %98 : vector<2x256xf32>
    %102 = arith.addf %85, %101 : vector<2x256xf32>
    %c5_48 = arith.constant 5 : index
    %c1_49 = arith.constant 1 : index
    %103 = memref.load %arg3[%c5_48, %c1_49] : memref<10x4xf32, #tpu.memory_space<smem>>
    %104 = vector.broadcast %103 : f32 to vector<2x256xf32>
    %105 = arith.mulf %104, %98 : vector<2x256xf32>
    %106 = arith.addf %89, %105 : vector<2x256xf32>
    %c5_50 = arith.constant 5 : index
    %c2_51 = arith.constant 2 : index
    %107 = memref.load %arg3[%c5_50, %c2_51] : memref<10x4xf32, #tpu.memory_space<smem>>
    %108 = vector.broadcast %107 : f32 to vector<2x256xf32>
    %109 = arith.mulf %108, %98 : vector<2x256xf32>
    %110 = arith.addf %93, %109 : vector<2x256xf32>
    %c5_52 = arith.constant 5 : index
    %c3_53 = arith.constant 3 : index
    %111 = memref.load %arg3[%c5_52, %c3_53] : memref<10x4xf32, #tpu.memory_space<smem>>
    %112 = vector.broadcast %111 : f32 to vector<2x256xf32>
    %113 = arith.mulf %112, %98 : vector<2x256xf32>
    %114 = arith.addf %97, %113 : vector<2x256xf32>
    %115 = vector.extract_strided_slice %7 {offsets = [0, 1536], sizes = [2, 256], strides = [1, 1]} : vector<2x2560xf32> to vector<2x256xf32>
    %c6 = arith.constant 6 : index
    %c0_54 = arith.constant 0 : index
    %116 = memref.load %arg3[%c6, %c0_54] : memref<10x4xf32, #tpu.memory_space<smem>>
    %117 = vector.broadcast %116 : f32 to vector<2x256xf32>
    %118 = arith.mulf %117, %115 : vector<2x256xf32>
    %119 = arith.addf %102, %118 : vector<2x256xf32>
    %c6_55 = arith.constant 6 : index
    %c1_56 = arith.constant 1 : index
    %120 = memref.load %arg3[%c6_55, %c1_56] : memref<10x4xf32, #tpu.memory_space<smem>>
    %121 = vector.broadcast %120 : f32 to vector<2x256xf32>
    %122 = arith.mulf %121, %115 : vector<2x256xf32>
    %123 = arith.addf %106, %122 : vector<2x256xf32>
    %c6_57 = arith.constant 6 : index
    %c2_58 = arith.constant 2 : index
    %124 = memref.load %arg3[%c6_57, %c2_58] : memref<10x4xf32, #tpu.memory_space<smem>>
    %125 = vector.broadcast %124 : f32 to vector<2x256xf32>
    %126 = arith.mulf %125, %115 : vector<2x256xf32>
    %127 = arith.addf %110, %126 : vector<2x256xf32>
    %c6_59 = arith.constant 6 : index
    %c3_60 = arith.constant 3 : index
    %128 = memref.load %arg3[%c6_59, %c3_60] : memref<10x4xf32, #tpu.memory_space<smem>>
    %129 = vector.broadcast %128 : f32 to vector<2x256xf32>
    %130 = arith.mulf %129, %115 : vector<2x256xf32>
    %131 = arith.addf %114, %130 : vector<2x256xf32>
    %132 = vector.extract_strided_slice %7 {offsets = [0, 1792], sizes = [2, 256], strides = [1, 1]} : vector<2x2560xf32> to vector<2x256xf32>
    %c7 = arith.constant 7 : index
    %c0_61 = arith.constant 0 : index
    %133 = memref.load %arg3[%c7, %c0_61] : memref<10x4xf32, #tpu.memory_space<smem>>
    %134 = vector.broadcast %133 : f32 to vector<2x256xf32>
    %135 = arith.mulf %134, %132 : vector<2x256xf32>
    %136 = arith.addf %119, %135 : vector<2x256xf32>
    %c7_62 = arith.constant 7 : index
    %c1_63 = arith.constant 1 : index
    %137 = memref.load %arg3[%c7_62, %c1_63] : memref<10x4xf32, #tpu.memory_space<smem>>
    %138 = vector.broadcast %137 : f32 to vector<2x256xf32>
    %139 = arith.mulf %138, %132 : vector<2x256xf32>
    %140 = arith.addf %123, %139 : vector<2x256xf32>
    %c7_64 = arith.constant 7 : index
    %c2_65 = arith.constant 2 : index
    %141 = memref.load %arg3[%c7_64, %c2_65] : memref<10x4xf32, #tpu.memory_space<smem>>
    %142 = vector.broadcast %141 : f32 to vector<2x256xf32>
    %143 = arith.mulf %142, %132 : vector<2x256xf32>
    %144 = arith.addf %127, %143 : vector<2x256xf32>
    %c7_66 = arith.constant 7 : index
    %c3_67 = arith.constant 3 : index
    %145 = memref.load %arg3[%c7_66, %c3_67] : memref<10x4xf32, #tpu.memory_space<smem>>
    %146 = vector.broadcast %145 : f32 to vector<2x256xf32>
    %147 = arith.mulf %146, %132 : vector<2x256xf32>
    %148 = arith.addf %131, %147 : vector<2x256xf32>
    %149 = vector.extract_strided_slice %7 {offsets = [0, 2048], sizes = [2, 256], strides = [1, 1]} : vector<2x2560xf32> to vector<2x256xf32>
    %c8 = arith.constant 8 : index
    %c0_68 = arith.constant 0 : index
    %150 = memref.load %arg3[%c8, %c0_68] : memref<10x4xf32, #tpu.memory_space<smem>>
    %151 = vector.broadcast %150 : f32 to vector<2x256xf32>
    %152 = arith.mulf %151, %149 : vector<2x256xf32>
    %153 = arith.addf %136, %152 : vector<2x256xf32>
    %c8_69 = arith.constant 8 : index
    %c1_70 = arith.constant 1 : index
    %154 = memref.load %arg3[%c8_69, %c1_70] : memref<10x4xf32, #tpu.memory_space<smem>>
    %155 = vector.broadcast %154 : f32 to vector<2x256xf32>
    %156 = arith.mulf %155, %149 : vector<2x256xf32>
    %157 = arith.addf %140, %156 : vector<2x256xf32>
    %c8_71 = arith.constant 8 : index
    %c2_72 = arith.constant 2 : index
    %158 = memref.load %arg3[%c8_71, %c2_72] : memref<10x4xf32, #tpu.memory_space<smem>>
    %159 = vector.broadcast %158 : f32 to vector<2x256xf32>
    %160 = arith.mulf %159, %149 : vector<2x256xf32>
    %161 = arith.addf %144, %160 : vector<2x256xf32>
    %c8_73 = arith.constant 8 : index
    %c3_74 = arith.constant 3 : index
    %162 = memref.load %arg3[%c8_73, %c3_74] : memref<10x4xf32, #tpu.memory_space<smem>>
    %163 = vector.broadcast %162 : f32 to vector<2x256xf32>
    %164 = arith.mulf %163, %149 : vector<2x256xf32>
    %165 = arith.addf %148, %164 : vector<2x256xf32>
    %166 = vector.extract_strided_slice %7 {offsets = [0, 2304], sizes = [2, 256], strides = [1, 1]} : vector<2x2560xf32> to vector<2x256xf32>
    %c9 = arith.constant 9 : index
    %c0_75 = arith.constant 0 : index
    %167 = memref.load %arg3[%c9, %c0_75] : memref<10x4xf32, #tpu.memory_space<smem>>
    %168 = vector.broadcast %167 : f32 to vector<2x256xf32>
    %169 = arith.mulf %168, %166 : vector<2x256xf32>
    %170 = arith.addf %153, %169 : vector<2x256xf32>
    %c9_76 = arith.constant 9 : index
    %c1_77 = arith.constant 1 : index
    %171 = memref.load %arg3[%c9_76, %c1_77] : memref<10x4xf32, #tpu.memory_space<smem>>
    %172 = vector.broadcast %171 : f32 to vector<2x256xf32>
    %173 = arith.mulf %172, %166 : vector<2x256xf32>
    %174 = arith.addf %157, %173 : vector<2x256xf32>
    %c9_78 = arith.constant 9 : index
    %c2_79 = arith.constant 2 : index
    %175 = memref.load %arg3[%c9_78, %c2_79] : memref<10x4xf32, #tpu.memory_space<smem>>
    %176 = vector.broadcast %175 : f32 to vector<2x256xf32>
    %177 = arith.mulf %176, %166 : vector<2x256xf32>
    %178 = arith.addf %161, %177 : vector<2x256xf32>
    %c9_80 = arith.constant 9 : index
    %c3_81 = arith.constant 3 : index
    %179 = memref.load %arg3[%c9_80, %c3_81] : memref<10x4xf32, #tpu.memory_space<smem>>
    %180 = vector.broadcast %179 : f32 to vector<2x256xf32>
    %181 = arith.mulf %180, %166 : vector<2x256xf32>
    %182 = arith.addf %165, %181 : vector<2x256xf32>
    %183 = vector.broadcast %8 : f32 to vector<2x256xf32>
    %184 = arith.addf %170, %183 : vector<2x256xf32>
    %cst_82 = arith.constant 0.000000e+00 : f32
    %185 = vector.broadcast %cst_82 : f32 to vector<2x256xf32>
    %186 = arith.maximumf %184, %185 : vector<2x256xf32>
    %c0_83 = arith.constant 0 : index
    %c0_84 = arith.constant 0 : index
    %187 = vector.load %arg5[%c0_83, %c0_84] : memref<2x1024xf32, #tpu.memory_space<vmem>>, vector<2x256xf32>
    tpu.vector_store %arg5[%c0_83, %c0_84], %186 {strides = array<i32>} : memref<2x1024xf32, #tpu.memory_space<vmem>>, vector<2x256xf32>,
    %188 = vector.broadcast %8 : f32 to vector<2x256xf32>
    %189 = arith.addf %174, %188 : vector<2x256xf32>
    %cst_85 = arith.constant 0.000000e+00 : f32
    %190 = vector.broadcast %cst_85 : f32 to vector<2x256xf32>
    %191 = arith.maximumf %189, %190 : vector<2x256xf32>
    %c0_86 = arith.constant 0 : index
    %c256 = arith.constant 256 : index
    %192 = vector.load %arg5[%c0_86, %c256] : memref<2x1024xf32, #tpu.memory_space<vmem>>, vector<2x256xf32>
    tpu.vector_store %arg5[%c0_86, %c256], %191 {strides = array<i32>} : memref<2x1024xf32, #tpu.memory_space<vmem>>, vector<2x256xf32>,
    %193 = vector.broadcast %8 : f32 to vector<2x256xf32>
    %194 = arith.addf %178, %193 : vector<2x256xf32>
    %cst_87 = arith.constant 0.000000e+00 : f32
    %195 = vector.broadcast %cst_87 : f32 to vector<2x256xf32>
    %196 = arith.maximumf %194, %195 : vector<2x256xf32>
    %c0_88 = arith.constant 0 : index
    %c512 = arith.constant 512 : index
    %197 = vector.load %arg5[%c0_88, %c512] : memref<2x1024xf32, #tpu.memory_space<vmem>>, vector<2x256xf32>
    tpu.vector_store %arg5[%c0_88, %c512], %196 {strides = array<i32>} : memref<2x1024xf32, #tpu.memory_space<vmem>>, vector<2x256xf32>,
    %198 = vector.broadcast %8 : f32 to vector<2x256xf32>
    %199 = arith.addf %182, %198 : vector<2x256xf32>
    %cst_89 = arith.constant 0.000000e+00 : f32
    %200 = vector.broadcast %cst_89 : f32 to vector<2x256xf32>
    %201 = arith.maximumf %199, %200 : vector<2x256xf32>
    %c0_90 = arith.constant 0 : index
    %c768 = arith.constant 768 : index
    %202 = vector.load %arg5[%c0_90, %c768] : memref<2x1024xf32, #tpu.memory_space<vmem>>, vector<2x256xf32>
    tpu.vector_store %arg5[%c0_90, %c768], %201 {strides = array<i32>} : memref<2x1024xf32, #tpu.memory_space<vmem>>, vector<2x256xf32>,
    return
  }
}

</mosaic_0001>

<llo_original>
// kernel: generator_forward.1
$region0: #{generator_forward.1}
  #allocation0 [shape = 'u32[]', space=smem, size = 0x4, offset = 0x4, fixed_abs, tag = 'smem constant byte address 0x4 - core index']
  #allocation1 [shape = 'u32[144,128]{1,0:T(1,128)}', space=vmem, size = 0x12000, scoped, tag = 'internal scratch']
  #allocation2 [shape = 'f32[1]{0:T(128)S(6)}', space=smem, size = 0x200, scoped, tag = 'scoped memory for generator_forward.1']
  %s0 = inlined_call_operand.vmem [shape: f32[2,32], index: 0, kind: input, shape index: {}]
  %s1 = inlined_call_operand.hbm [shape: f32[32,2560], index: 1, kind: input, shape index: {}]
  %s2 = inlined_call_operand.vmem [shape: f32[1,2560], index: 2, kind: input, shape index: {}]
  %s3 = inlined_call_operand.vmem [shape: f32[10,4], index: 3, kind: input, shape index: {}]
  %s4 = inlined_call_operand.<no memory space> [shape: f32[1], index: 4, kind: input, shape index: {}]
  %s5 = inlined_call_operand.vmem [shape: f32[2,1024], index: 5, kind: output, shape index: {}]
  %s6 = sld [smem:[#allocation0]]
  $region38: #{generator_forward.1} parent=0
    _
  %s8 = ssub.s32 1, %s6
  %s9 = scalar_select 0, %s8, %s6
  %10 = sst [smem:[#allocation2]] %s4
  $region1: #{generator_forward.1} parent=0
    #allocation3 [shape = 'u8[327680]{0}', space=vmem, size = 0x50000, scoped, tag = 'input window, operand 1, single buffered']
    #allocation4 [shape = 's32[1]{0}', space=sflag, size = 0x4, scoped, tag = 'scoped memory for generator_forward.1']
    #allocation5 [shape = 's32[1]{0}', space=sflag, size = 0x4, scoped, tag = 'scoped memory for generator_forward.1']
    #allocation6 [shape = 'u8[8192]{0}', space=smem, size = 0x2000, scoped, tag = 'input window, operand 3, single buffered']
    %11 = vsyncpa [#allocation4], 0
    %12 = vsyncpa [#allocation5], 0
    // Predicated region
    $region2: #{generator_forward.1} parent=1 // pred_check
      _
    $region3: #{generator_forward.1} parent=1 // pred_check_branch
      %14 = sbr.rel (0) target = $region5
    $region4: #{generator_forward.1} parent=1 // pred_region
      _
    $region5: #{generator_forward.1} parent=1 // pred_fallthru
      _
    // Predicated region
    $region6: #{generator_forward.1} parent=1 // pred_check
      _
    $region7: #{generator_forward.1} parent=1 // pred_check_branch
      %16 = sbr.rel (0) target = $region9
    $region8: #{generator_forward.1} parent=1 // pred_region
      %s18 = ssub.s32 10240, 10240
      %19 = vsyncadd [#allocation4], %s18
      %s20 = sshll.u32 [#allocation3], 4
      %s21 = int_to_ptr.vmem [resolvable:$true] %s20
      %26 = dma.hbm_to_vmem [thread:$0]  %s1, 10240, %s21, [#allocation4], 2560, 2560, 160
    $region9: #{generator_forward.1} parent=1 // pred_fallthru
      _
    // Predicated region
    $region10: #{generator_forward.1} parent=1 // pred_check
      _
    $region11: #{generator_forward.1} parent=1 // pred_check_branch
      %28 = sbr.rel (0) target = $region13
    $region12: #{generator_forward.1} parent=1 // pred_region
      _
    $region13: #{generator_forward.1} parent=1 // pred_fallthru
      _
    // Predicated region
    $region14: #{generator_forward.1} parent=1 // pred_check
      _
    $region15: #{generator_forward.1} parent=1 // pred_check_branch
      %30 = sbr.rel (0) target = $region17
    $region16: #{generator_forward.1} parent=1 // pred_region
      %s32 = ssub.s32 256, 256
      %33 = vsyncadd [#allocation5], %s32
      %s34 = sshll.u32 %s3, 4
      %s35 = int_to_ptr.vmem [resolvable:$true] %s34
      %40 = dma.vmem_to_smem %s35, 256, [#allocation6], [#allocation5], 128, 128, 8
    $region17: #{generator_forward.1} parent=1 // pred_fallthru
      _
    // Predicated region
    $region18: #{generator_forward.1} parent=1 // pred_check
      _
    $region19: #{generator_forward.1} parent=1 // pred_check_branch
      %42 = sbr.rel (0) target = $region21
    $region20: #{generator_forward.1} parent=1 // pred_region
      _
    $region21: #{generator_forward.1} parent=1 // pred_fallthru
      _
    // Predicated region
    $region22: #{generator_forward.1} parent=1 // pred_check
      _
    $region23: #{generator_forward.1} parent=1 // pred_check_branch
      %44 = sbr.rel (0) target = $region25
    $region24: #{generator_forward.1} parent=1 // pred_region
      %45 = dma.done [#allocation4], 10240
    $region25: #{generator_forward.1} parent=1 // pred_fallthru
      _
    // Predicated region
    $region26: #{generator_forward.1} parent=1 // pred_check
      _
    $region27: #{generator_forward.1} parent=1 // pred_check_branch
      %47 = sbr.rel (0) target = $region29
    $region28: #{generator_forward.1} parent=1 // pred_region
      %48 = dma.done [#allocation5], 256
    $region29: #{generator_forward.1} parent=1 // pred_fallthru
      _
    %49 = sfence
    %v50 = vld [vmem:[%s0] sm:$0x3]
    %v51 = vld [vmem:[#allocation3] sm:$0xff]
    %v52 = vld [vmem:[#allocation3 + $0x8] sm:$0xff]
    %v53 = vld [vmem:[#allocation3 + $0x10] sm:$0xff]
    %v54 = vld [vmem:[#allocation3 + $0x18] sm:$0xff]
    %v55 = vld [vmem:[#allocation3 + $0x20] sm:$0xff]
    %v56 = vld [vmem:[#allocation3 + $0x28] sm:$0xff]
    %v57 = vld [vmem:[#allocation3 + $0x30] sm:$0xff]
    %v58 = vld [vmem:[#allocation3 + $0x38] sm:$0xff]
    %v59 = vld [vmem:[#allocation3 + $0x40] sm:$0xff]
    %v60 = vld [vmem:[#allocation3 + $0x48] sm:$0xff]
    %v61 = vld [vmem:[#allocation3 + $0x50] sm:$0xff]
    %v62 = vld [vmem:[#allocation3 + $0x58] sm:$0xff]
    %v63 = vld [vmem:[#allocation3 + $0x60] sm:$0xff]
    %v64 = vld [vmem:[#allocation3 + $0x68] sm:$0xff]
    %v65 = vld [vmem:[#allocation3 + $0x70] sm:$0xff]
    %v66 = vld [vmem:[#allocation3 + $0x78] sm:$0xff]
    %v67 = vld [vmem:[#allocation3 + $0x80] sm:$0xff]
    %v68 = vld [vmem:[#allocation3 + $0x88] sm:$0xff]
    %v69 = vld [vmem:[#allocation3 + $0x90] sm:$0xff]
    %v70 = vld [vmem:[#allocation3 + $0x98] sm:$0xff]
    %v71 = vld [vmem:[#allocation3 + $0xa0] sm:$0xff]
    %v72 = vld [vmem:[#allocation3 + $0xa8] sm:$0xff]
    %v73 = vld [vmem:[#allocation3 + $0xb0] sm:$0xff]
    %v74 = vld [vmem:[#allocation3 + $0xb8] sm:$0xff]
    %v75 = vld [vmem:[#allocation3 + $0xc0] sm:$0xff]
    %v76 = vld [vmem:[#allocation3 + $0xc8] sm:$0xff]
    %v77 = vld [vmem:[#allocation3 + $0xd0] sm:$0xff]
    %v78 = vld [vmem:[#allocation3 + $0xd8] sm:$0xff]
    %v79 = vld [vmem:[#allocation3 + $0xe0] sm:$0xff]
    %v80 = vld [vmem:[#allocation3 + $0xe8] sm:$0xff]
    %v81 = vld [vmem:[#allocation3 + $0xf0] sm:$0xff]
    %v82 = vld [vmem:[#allocation3 + $0xf8] sm:$0xff]
    %v83 = vld [vmem:[#allocation3 + $0x100] sm:$0xff]
    %v84 = vld [vmem:[#allocation3 + $0x108] sm:$0xff]
    %v85 = vld [vmem:[#allocation3 + $0x110] sm:$0xff]
    %v86 = vld [vmem:[#allocation3 + $0x118] sm:$0xff]
    %v87 = vld [vmem:[#allocation3 + $0x120] sm:$0xff]
    %v88 = vld [vmem:[#allocation3 + $0x128] sm:$0xff]
    %v89 = vld [vmem:[#allocation3 + $0x130] sm:$0xff]
    %v90 = vld [vmem:[#allocation3 + $0x138] sm:$0xff]
    %v91 = vld [vmem:[#allocation3 + $0x140] sm:$0xff]
    %v92 = vld [vmem:[#allocation3 + $0x148] sm:$0xff]
    %v93 = vld [vmem:[#allocation3 + $0x150] sm:$0xff]
    %v94 = vld [vmem:[#allocation3 + $0x158] sm:$0xff]
    %v95 = vld [vmem:[#allocation3 + $0x160] sm:$0xff]
    %v96 = vld [vmem:[#allocation3 + $0x168] sm:$0xff]
    %v97 = vld [vmem:[#allocation3 + $0x170] sm:$0xff]
    %v98 = vld [vmem:[#allocation3 + $0x178] sm:$0xff]
    %v99 = vld [vmem:[#allocation3 + $0x180] sm:$0xff]
    %v100 = vld [vmem:[#allocation3 + $0x188] sm:$0xff]
    %v101 = vld [vmem:[#allocation3 + $0x190] sm:$0xff]
    %v102 = vld [vmem:[#allocation3 + $0x198] sm:$0xff]
    %v103 = vld [vmem:[#allocation3 + $0x1a0] sm:$0xff]
    %v104 = vld [vmem:[#allocation3 + $0x1a8] sm:$0xff]
    %v105 = vld [vmem:[#allocation3 + $0x1b0] sm:$0xff]
    %v106 = vld [vmem:[#allocation3 + $0x1b8] sm:$0xff]
    %v107 = vld [vmem:[#allocation3 + $0x1c0] sm:$0xff]
    %v108 = vld [vmem:[#allocation3 + $0x1c8] sm:$0xff]
    %v109 = vld [vmem:[#allocation3 + $0x1d0] sm:$0xff]
    %v110 = vld [vmem:[#allocation3 + $0x1d8] sm:$0xff]
    %v111 = vld [vmem:[#allocation3 + $0x1e0] sm:$0xff]
    %v112 = vld [vmem:[#allocation3 + $0x1e8] sm:$0xff]
    %v113 = vld [vmem:[#allocation3 + $0x1f0] sm:$0xff]
    %v114 = vld [vmem:[#allocation3 + $0x1f8] sm:$0xff]
    %v115 = vld [vmem:[#allocation3 + $0x200] sm:$0xff]
    %v116 = vld [vmem:[#allocation3 + $0x208] sm:$0xff]
    %v117 = vld [vmem:[#allocation3 + $0x210] sm:$0xff]
    %v118 = vld [vmem:[#allocation3 + $0x218] sm:$0xff]
    %v119 = vld [vmem:[#allocation3 + $0x220] sm:$0xff]
    %v120 = vld [vmem:[#allocation3 + $0x228] sm:$0xff]
    %v121 = vld [vmem:[#allocation3 + $0x230] sm:$0xff]
    %v122 = vld [vmem:[#allocation3 + $0x238] sm:$0xff]
    %v123 = vld [vmem:[#allocation3 + $0x240] sm:$0xff]
    %v124 = vld [vmem:[#allocation3 + $0x248] sm:$0xff]
    %v125 = vld [vmem:[#allocation3 + $0x250] sm:$0xff]
    %v126 = vld [vmem:[#allocation3 + $0x258] sm:$0xff]
    %v127 = vld [vmem:[#allocation3 + $0x260] sm:$0xff]
    %v128 = vld [vmem:[#allocation3 + $0x268] sm:$0xff]
    %v129 = vld [vmem:[#allocation3 + $0x270] sm:$0xff]
    %v130 = vld [vmem:[#allocation3 + $0x278] sm:$0xff]
    %v131 = vld [vmem:[%s2] sm:$0xff]
    %v132 = vld [vmem:[%s2 + $0x8] sm:$0xff]
    %v133 = vld [vmem:[%s2 + $0x10] sm:$0xf]
    %v137 = vlaneseq
    %v138 = vshrl.u32 %v137, 7
    %v139 = vsub.s32 0, %v138
    %v140 = vrot.slane %v131, %v139
    %v141 = vlaneseq
    %v142 = vshrl.u32 %v141, 7
    %v143 = vsub.s32 1, %v142
    %v144 = vrot.slane %v131, %v143
    %v145 = vlaneseq
    %v146 = vshrl.u32 %v145, 7
    %v147 = vsub.s32 2, %v146
    %v148 = vrot.slane %v131, %v147
    %v149 = vlaneseq
    %v150 = vshrl.u32 %v149, 7
    %v151 = vsub.s32 3, %v150
    %v152 = vrot.slane %v131, %v151
    %v153 = vlaneseq
    %v154 = vshrl.u32 %v153, 7
    %v155 = vsub.s32 4, %v154
    %v156 = vrot.slane %v131, %v155
    %v157 = vlaneseq
    %v158 = vshrl.u32 %v157, 7
    %v159 = vsub.s32 5, %v158
    %v160 = vrot.slane %v131, %v159
    %v161 = vlaneseq
    %v162 = vshrl.u32 %v161, 7
    %v163 = vsub.s32 6, %v162
    %v164 = vrot.slane %v131, %v163
    %v165 = vlaneseq
    %v166 = vshrl.u32 %v165, 7
    %v167 = vsub.s32 7, %v166
    %v168 = vrot.slane %v131, %v167
    %v169 = vlaneseq
    %v170 = vshrl.u32 %v169, 7
    %v171 = vsub.s32 0, %v170
    %v172 = vrot.slane %v132, %v171
    %v173 = vlaneseq
    %v174 = vshrl.u32 %v173, 7
    %v175 = vsub.s32 1, %v174
    %v176 = vrot.slane %v132, %v175
    %v177 = vlaneseq
    %v178 = vshrl.u32 %v177, 7
    %v179 = vsub.s32 2, %v178
    %v180 = vrot.slane %v132, %v179
    %v181 = vlaneseq
    %v182 = vshrl.u32 %v181, 7
    %v183 = vsub.s32 3, %v182
    %v184 = vrot.slane %v132, %v183
    %v185 = vlaneseq
    %v186 = vshrl.u32 %v185, 7
    %v187 = vsub.s32 4, %v186
    %v188 = vrot.slane %v132, %v187
    %v189 = vlaneseq
    %v190 = vshrl.u32 %v189, 7
    %v191 = vsub.s32 5, %v190
    %v192 = vrot.slane %v132, %v191
    %v193 = vlaneseq
    %v194 = vshrl.u32 %v193, 7
    %v195 = vsub.s32 6, %v194
    %v196 = vrot.slane %v132, %v195
    %v197 = vlaneseq
    %v198 = vshrl.u32 %v197, 7
    %v199 = vsub.s32 7, %v198
    %v200 = vrot.slane %v132, %v199
    %v201 = vlaneseq
    %v202 = vshrl.u32 %v201, 7
    %v203 = vsub.s32 0, %v202
    %v204 = vrot.slane %v133, %v203
    %v205 = vlaneseq
    %v206 = vshrl.u32 %v205, 7
    %v207 = vsub.s32 1, %v206
    %v208 = vrot.slane %v133, %v207
    %v209 = vlaneseq
    %v210 = vshrl.u32 %v209, 7
    %v211 = vsub.s32 2, %v210
    %v212 = vrot.slane %v133, %v211
    %v213 = vlaneseq
    %v214 = vshrl.u32 %v213, 7
    %v215 = vsub.s32 3, %v214
    %v216 = vrot.slane %v133, %v215
    %vm237 = vcmask 261120
    %v239 = vsel %vm237, %v50, 0
    %241 = vmatprep.subr.mxu0 %v52
    %242 = vmatpush1.msra.mxu0 %v51
    %243 = vmatprep.subr.mxu0 %v72
    %244 = vmatpush1.msra.mxu0 %v71
    %245 = vmatprep.subr.mxu0 %v92
    %246 = vmatpush1.msra.mxu0 %v91
    %247 = vmatprep.subr.mxu0 %v112
    %248 = vmatpush1.msra.mxu0 %v111
    %249 = vmatprep.subr.mxu0 0.0
    %250 = vmatpush1.msra.mxu0 0.0
    %251 = vmatprep.subr.mxu0 0.0
    %252 = vmatpush1.msra.mxu0 0.0
    %253 = vmatprep.subr.mxu0 0.0
    %254 = vmatpush1.msra.mxu0 0.0
    %255 = vmatprep.subr.mxu0 0.0
    %256 = vmatpush1.msra.mxu0 0.0
    %257 = vmatprep.subr.mxu0 0.0
    %258 = vmatpush1.msra.mxu0 0.0
    %259 = vmatprep.subr.mxu0 0.0
    %260 = vmatpush1.msra.mxu0 0.0
    %261 = vmatprep.subr.mxu0 0.0
    %262 = vmatpush1.msra.mxu0 0.0
    %263 = vmatprep.subr.mxu0 0.0
    %264 = vmatpush1.msra.mxu0 0.0
    %265 = vmatprep.subr.mxu0 0.0
    %266 = vmatpush1.msra.mxu0 0.0
    %267 = vmatprep.subr.mxu0 0.0
    %268 = vmatpush1.msra.mxu0 0.0
    %269 = vmatprep.subr.mxu0 0.0
    %270 = vmatpush1.msra.mxu0 0.0
    %271 = vmatprep.subr.mxu0 0.0
    %272 = vmatpush1.msra.mxu0 0.0
    %273 = vmatprep.subr.mxu0 0.0
    %274 = vmatpush1.msra.mxu0 0.0
    %275 = vmatprep.subr.mxu0 0.0
    %276 = vmatpush1.msra.mxu0 0.0
    %277 = vmatprep.subr.mxu0 0.0
    %278 = vmatpush1.msra.mxu0 0.0
    %279 = vmatprep.subr.mxu0 0.0
    %280 = vmatpush1.msra.mxu0 0.0
    %281 = vmatprep.subr.mxu0 0.0
    %282 = vmatpush1.msra.mxu0 0.0
    %283 = vmatprep.subr.mxu0 0.0
    %284 = vmatpush1.msra.mxu0 0.0
    %285 = vmatprep.subr.mxu0 0.0
    %286 = vmatpush1.msra.mxu0 0.0
    %287 = vmatprep.subr.mxu0 0.0
    %288 = vmatpush1.msra.mxu0 0.0
    %289 = vmatprep.subr.mxu0 0.0
    %290 = vmatpush1.msra.mxu0 0.0
    %291 = vmatprep.subr.mxu0 0.0
    %292 = vmatpush1.msra.mxu0 0.0
    %293 = vmatprep.subr.mxu0 0.0
    %294 = vmatpush1.msra.mxu0 0.0
    %295 = vmatprep.subr.mxu0 0.0
    %296 = vmatpush1.msra.mxu0 0.0
    %297 = vmatprep.subr.mxu0 0.0
    %298 = vmatpush1.msra.mxu0 0.0
    %299 = vmatprep.subr.mxu0 0.0
    %300 = vmatpush1.msra.mxu0 0.0
    %301 = vmatprep.subr.mxu0 0.0
    %302 = vmatpush1.msra.mxu0 0.0
    %303 = vmatprep.subr.mxu0 0.0
    %304 = vmatpush1.msra.mxu0 0.0
    %305 = vmatprep.mubr.f32.mxu0 0.0
    %306 = vmatmul.mubr.f32.gmra.mrb[0].mxu0 %v239
    %v307 = vpop.f32.mrb[0].mxu0
    %v308 = vadd.f32 %v140, %v307
    %v309 = vpop.f32.mrb[0].mxu0
    %v310 = vadd.f32 %v144, %v309
    %311 = vdwg.mxu0
    %312 = vmatprep.subr.mxu0 %v54
    %313 = vmatpush1.msra.mxu0 %v53
    %314 = vmatprep.subr.mxu0 %v74
    %315 = vmatpush1.msra.mxu0 %v73
    %316 = vmatprep.subr.mxu0 %v94
    %317 = vmatpush1.msra.mxu0 %v93
    %318 = vmatprep.subr.mxu0 %v114
    %319 = vmatpush1.msra.mxu0 %v113
    %320 = vmatprep.subr.mxu0 0.0
    %321 = vmatpush1.msra.mxu0 0.0
    %322 = vmatprep.subr.mxu0 0.0
    %323 = vmatpush1.msra.mxu0 0.0
    %324 = vmatprep.subr.mxu0 0.0
    %325 = vmatpush1.msra.mxu0 0.0
    %326 = vmatprep.subr.mxu0 0.0
    %327 = vmatpush1.msra.mxu0 0.0
    %328 = vmatprep.subr.mxu0 0.0
    %329 = vmatpush1.msra.mxu0 0.0
    %330 = vmatprep.subr.mxu0 0.0
    %331 = vmatpush1.msra.mxu0 0.0
    %332 = vmatprep.subr.mxu0 0.0
    %333 = vmatpush1.msra.mxu0 0.0
    %334 = vmatprep.subr.mxu0 0.0
    %335 = vmatpush1.msra.mxu0 0.0
    %336 = vmatprep.subr.mxu0 0.0
    %337 = vmatpush1.msra.mxu0 0.0
    %338 = vmatprep.subr.mxu0 0.0
    %339 = vmatpush1.msra.mxu0 0.0
    %340 = vmatprep.subr.mxu0 0.0
    %341 = vmatpush1.msra.mxu0 0.0
    %342 = vmatprep.subr.mxu0 0.0
    %343 = vmatpush1.msra.mxu0 0.0
    %344 = vmatprep.subr.mxu0 0.0
    %345 = vmatpush1.msra.mxu0 0.0
    %346 = vmatprep.subr.mxu0 0.0
    %347 = vmatpush1.msra.mxu0 0.0
    %348 = vmatprep.subr.mxu0 0.0
    %349 = vmatpush1.msra.mxu0 0.0
    %350 = vmatprep.subr.mxu0 0.0
    %351 = vmatpush1.msra.mxu0 0.0
    %352 = vmatprep.subr.mxu0 0.0
    %353 = vmatpush1.msra.mxu0 0.0
    %354 = vmatprep.subr.mxu0 0.0
    %355 = vmatpush1.msra.mxu0 0.0
    %356 = vmatprep.subr.mxu0 0.0
    %357 = vmatpush1.msra.mxu0 0.0
    %358 = vmatprep.subr.mxu0 0.0
    %359 = vmatpush1.msra.mxu0 0.0
    %360 = vmatprep.subr.mxu0 0.0
    %361 = vmatpush1.msra.mxu0 0.0
    %362 = vmatprep.subr.mxu0 0.0
    %363 = vmatpush1.msra.mxu0 0.0
    %364 = vmatprep.subr.mxu0 0.0
    %365 = vmatpush1.msra.mxu0 0.0
    %366 = vmatprep.subr.mxu0 0.0
    %367 = vmatpush1.msra.mxu0 0.0
    %368 = vmatprep.subr.mxu0 0.0
    %369 = vmatpush1.msra.mxu0 0.0
    %370 = vmatprep.subr.mxu0 0.0
    %371 = vmatpush1.msra.mxu0 0.0
    %372 = vmatprep.subr.mxu0 0.0
    %373 = vmatpush1.msra.mxu0 0.0
    %374 = vmatprep.subr.mxu0 0.0
    %375 = vmatpush1.msra.mxu0 0.0
    %376 = vmatprep.mubr.f32.mxu0 0.0
    %377 = vmatmul.mubr.f32.gmra.mrb[0].mxu0 %v239
    %v378 = vpop.f32.mrb[0].mxu0
    %v379 = vadd.f32 %v148, %v378
    %v380 = vpop.f32.mrb[0].mxu0
    %v381 = vadd.f32 %v152, %v380
    %382 = vdwg.mxu0
    %383 = vmatprep.subr.mxu0 %v56
    %384 = vmatpush1.msra.mxu0 %v55
    %385 = vmatprep.subr.mxu0 %v76
    %386 = vmatpush1.msra.mxu0 %v75
    %387 = vmatprep.subr.mxu0 %v96
    %388 = vmatpush1.msra.mxu0 %v95
    %389 = vmatprep.subr.mxu0 %v116
    %390 = vmatpush1.msra.mxu0 %v115
    %391 = vmatprep.subr.mxu0 0.0
    %392 = vmatpush1.msra.mxu0 0.0
    %393 = vmatprep.subr.mxu0 0.0
    %394 = vmatpush1.msra.mxu0 0.0
    %395 = vmatprep.subr.mxu0 0.0
    %396 = vmatpush1.msra.mxu0 0.0
    %397 = vmatprep.subr.mxu0 0.0
    %398 = vmatpush1.msra.mxu0 0.0
    %399 = vmatprep.subr.mxu0 0.0
    %400 = vmatpush1.msra.mxu0 0.0
    %401 = vmatprep.subr.mxu0 0.0
    %402 = vmatpush1.msra.mxu0 0.0
    %403 = vmatprep.subr.mxu0 0.0
    %404 = vmatpush1.msra.mxu0 0.0
    %405 = vmatprep.subr.mxu0 0.0
    %406 = vmatpush1.msra.mxu0 0.0
    %407 = vmatprep.subr.mxu0 0.0
    %408 = vmatpush1.msra.mxu0 0.0
    %409 = vmatprep.subr.mxu0 0.0
    %410 = vmatpush1.msra.mxu0 0.0
    %411 = vmatprep.subr.mxu0 0.0
    %412 = vmatpush1.msra.mxu0 0.0
    %413 = vmatprep.subr.mxu0 0.0
    %414 = vmatpush1.msra.mxu0 0.0
    %415 = vmatprep.subr.mxu0 0.0
    %416 = vmatpush1.msra.mxu0 0.0
    %417 = vmatprep.subr.mxu0 0.0
    %418 = vmatpush1.msra.mxu0 0.0
    %419 = vmatprep.subr.mxu0 0.0
    %420 = vmatpush1.msra.mxu0 0.0
    %421 = vmatprep.subr.mxu0 0.0
    %422 = vmatpush1.msra.mxu0 0.0
    %423 = vmatprep.subr.mxu0 0.0
    %424 = vmatpush1.msra.mxu0 0.0
    %425 = vmatprep.subr.mxu0 0.0
    %426 = vmatpush1.msra.mxu0 0.0
    %427 = vmatprep.subr.mxu0 0.0
    %428 = vmatpush1.msra.mxu0 0.0
    %429 = vmatprep.subr.mxu0 0.0
    %430 = vmatpush1.msra.mxu0 0.0
    %431 = vmatprep.subr.mxu0 0.0
    %432 = vmatpush1.msra.mxu0 0.0
    %433 = vmatprep.subr.mxu0 0.0
    %434 = vmatpush1.msra.mxu0 0.0
    %435 = vmatprep.subr.mxu0 0.0
    %436 = vmatpush1.msra.mxu0 0.0
    %437 = vmatprep.subr.mxu0 0.0
    %438 = vmatpush1.msra.mxu0 0.0
    %439 = vmatprep.subr.mxu0 0.0
    %440 = vmatpush1.msra.mxu0 0.0
    %441 = vmatprep.subr.mxu0 0.0
    %442 = vmatpush1.msra.mxu0 0.0
    %443 = vmatprep.subr.mxu0 0.0
    %444 = vmatpush1.msra.mxu0 0.0
    %445 = vmatprep.subr.mxu0 0.0
    %446 = vmatpush1.msra.mxu0 0.0
    %447 = vmatprep.mubr.f32.mxu0 0.0
    %448 = vmatmul.mubr.f32.gmra.mrb[0].mxu0 %v239
    %v449 = vpop.f32.mrb[0].mxu0
    %v450 = vadd.f32 %v156, %v449
    %v451 = vpop.f32.mrb[0].mxu0
    %v452 = vadd.f32 %v160, %v451
    %453 = vdwg.mxu0
    %454 = vmatprep.subr.mxu0 %v58
    %455 = vmatpush1.msra.mxu0 %v57
    %456 = vmatprep.subr.mxu0 %v78
    %457 = vmatpush1.msra.mxu0 %v77
    %458 = vmatprep.subr.mxu0 %v98
    %459 = vmatpush1.msra.mxu0 %v97
    %460 = vmatprep.subr.mxu0 %v118
    %461 = vmatpush1.msra.mxu0 %v117
    %462 = vmatprep.subr.mxu0 0.0
    %463 = vmatpush1.msra.mxu0 0.0
    %464 = vmatprep.subr.mxu0 0.0
    %465 = vmatpush1.msra.mxu0 0.0
    %466 = vmatprep.subr.mxu0 0.0
    %467 = vmatpush1.msra.mxu0 0.0
    %468 = vmatprep.subr.mxu0 0.0
    %469 = vmatpush1.msra.mxu0 0.0
    %470 = vmatprep.subr.mxu0 0.0
    %471 = vmatpush1.msra.mxu0 0.0
    %472 = vmatprep.subr.mxu0 0.0
    %473 = vmatpush1.msra.mxu0 0.0
    %474 = vmatprep.subr.mxu0 0.0
    %475 = vmatpush1.msra.mxu0 0.0
    %476 = vmatprep.subr.mxu0 0.0
    %477 = vmatpush1.msra.mxu0 0.0
    %478 = vmatprep.subr.mxu0 0.0
    %479 = vmatpush1.msra.mxu0 0.0
    %480 = vmatprep.subr.mxu0 0.0
    %481 = vmatpush1.msra.mxu0 0.0
    %482 = vmatprep.subr.mxu0 0.0
    %483 = vmatpush1.msra.mxu0 0.0
    %484 = vmatprep.subr.mxu0 0.0
    %485 = vmatpush1.msra.mxu0 0.0
    %486 = vmatprep.subr.mxu0 0.0
    %487 = vmatpush1.msra.mxu0 0.0
    %488 = vmatprep.subr.mxu0 0.0
    %489 = vmatpush1.msra.mxu0 0.0
    %490 = vmatprep.subr.mxu0 0.0
    %491 = vmatpush1.msra.mxu0 0.0
    %492 = vmatprep.subr.mxu0 0.0
    %493 = vmatpush1.msra.mxu0 0.0
    %494 = vmatprep.subr.mxu0 0.0
    %495 = vmatpush1.msra.mxu0 0.0
    %496 = vmatprep.subr.mxu0 0.0
    %497 = vmatpush1.msra.mxu0 0.0
    %498 = vmatprep.subr.mxu0 0.0
    %499 = vmatpush1.msra.mxu0 0.0
    %500 = vmatprep.subr.mxu0 0.0
    %501 = vmatpush1.msra.mxu0 0.0
    %502 = vmatprep.subr.mxu0 0.0
    %503 = vmatpush1.msra.mxu0 0.0
    %504 = vmatprep.subr.mxu0 0.0
    %505 = vmatpush1.msra.mxu0 0.0
    %506 = vmatprep.subr.mxu0 0.0
    %507 = vmatpush1.msra.mxu0 0.0
    %508 = vmatprep.subr.mxu0 0.0
    %509 = vmatpush1.msra.mxu0 0.0
    %510 = vmatprep.subr.mxu0 0.0
    %511 = vmatpush1.msra.mxu0 0.0
    %512 = vmatprep.subr.mxu0 0.0
    %513 = vmatpush1.msra.mxu0 0.0
    %514 = vmatprep.subr.mxu0 0.0
    %515 = vmatpush1.msra.mxu0 0.0
    %516 = vmatprep.subr.mxu0 0.0
    %517 = vmatpush1.msra.mxu0 0.0
    %518 = vmatprep.mubr.f32.mxu0 0.0
    %519 = vmatmul.mubr.f32.gmra.mrb[0].mxu0 %v239
    %v520 = vpop.f32.mrb[0].mxu0
    %v521 = vadd.f32 %v164, %v520
    %v522 = vpop.f32.mrb[0].mxu0
    %v523 = vadd.f32 %v168, %v522
    %524 = vdwg.mxu0
    %525 = vmatprep.subr.mxu0 %v60
    %526 = vmatpush1.msra.mxu0 %v59
    %527 = vmatprep.subr.mxu0 %v80
    %528 = vmatpush1.msra.mxu0 %v79
    %529 = vmatprep.subr.mxu0 %v100
    %530 = vmatpush1.msra.mxu0 %v99
    %531 = vmatprep.subr.mxu0 %v120
    %532 = vmatpush1.msra.mxu0 %v119
    %533 = vmatprep.subr.mxu0 0.0
    %534 = vmatpush1.msra.mxu0 0.0
    %535 = vmatprep.subr.mxu0 0.0
    %536 = vmatpush1.msra.mxu0 0.0
    %537 = vmatprep.subr.mxu0 0.0
    %538 = vmatpush1.msra.mxu0 0.0
    %539 = vmatprep.subr.mxu0 0.0
    %540 = vmatpush1.msra.mxu0 0.0
    %541 = vmatprep.subr.mxu0 0.0
    %542 = vmatpush1.msra.mxu0 0.0
    %543 = vmatprep.subr.mxu0 0.0
    %544 = vmatpush1.msra.mxu0 0.0
    %545 = vmatprep.subr.mxu0 0.0
    %546 = vmatpush1.msra.mxu0 0.0
    %547 = vmatprep.subr.mxu0 0.0
    %548 = vmatpush1.msra.mxu0 0.0
    %549 = vmatprep.subr.mxu0 0.0
    %550 = vmatpush1.msra.mxu0 0.0
    %551 = vmatprep.subr.mxu0 0.0
    %552 = vmatpush1.msra.mxu0 0.0
    %553 = vmatprep.subr.mxu0 0.0
    %554 = vmatpush1.msra.mxu0 0.0
    %555 = vmatprep.subr.mxu0 0.0
    %556 = vmatpush1.msra.mxu0 0.0
    %557 = vmatprep.subr.mxu0 0.0
    %558 = vmatpush1.msra.mxu0 0.0
    %559 = vmatprep.subr.mxu0 0.0
    %560 = vmatpush1.msra.mxu0 0.0
    %561 = vmatprep.subr.mxu0 0.0
    %562 = vmatpush1.msra.mxu0 0.0
    %563 = vmatprep.subr.mxu0 0.0
    %564 = vmatpush1.msra.mxu0 0.0
    %565 = vmatprep.subr.mxu0 0.0
    %566 = vmatpush1.msra.mxu0 0.0
    %567 = vmatprep.subr.mxu0 0.0
    %568 = vmatpush1.msra.mxu0 0.0
    %569 = vmatprep.subr.mxu0 0.0
    %570 = vmatpush1.msra.mxu0 0.0
    %571 = vmatprep.subr.mxu0 0.0
    %572 = vmatpush1.msra.mxu0 0.0
    %573 = vmatprep.subr.mxu0 0.0
    %574 = vmatpush1.msra.mxu0 0.0
    %575 = vmatprep.subr.mxu0 0.0
    %576 = vmatpush1.msra.mxu0 0.0
    %577 = vmatprep.subr.mxu0 0.0
    %578 = vmatpush1.msra.mxu0 0.0
    %579 = vmatprep.subr.mxu0 0.0
    %580 = vmatpush1.msra.mxu0 0.0
    %581 = vmatprep.subr.mxu0 0.0
    %582 = vmatpush1.msra.mxu0 0.0
    %583 = vmatprep.subr.mxu0 0.0
    %584 = vmatpush1.msra.mxu0 0.0
    %585 = vmatprep.subr.mxu0 0.0
    %586 = vmatpush1.msra.mxu0 0.0
    %587 = vmatprep.subr.mxu0 0.0
    %588 = vmatpush1.msra.mxu0 0.0
    %589 = vmatprep.mubr.f32.mxu0 0.0
    %590 = vmatmul.mubr.f32.gmra.mrb[0].mxu0 %v239
    %v591 = vpop.f32.mrb[0].mxu0
    %v592 = vadd.f32 %v172, %v591
    %v593 = vpop.f32.mrb[0].mxu0
    %v594 = vadd.f32 %v176, %v593
    %595 = vdwg.mxu0
    %596 = vmatprep.subr.mxu0 %v62
    %597 = vmatpush1.msra.mxu0 %v61
    %598 = vmatprep.subr.mxu0 %v82
    %599 = vmatpush1.msra.mxu0 %v81
    %600 = vmatprep.subr.mxu0 %v102
    %601 = vmatpush1.msra.mxu0 %v101
    %602 = vmatprep.subr.mxu0 %v122
    %603 = vmatpush1.msra.mxu0 %v121
    %604 = vmatprep.subr.mxu0 0.0
    %605 = vmatpush1.msra.mxu0 0.0
    %606 = vmatprep.subr.mxu0 0.0
    %607 = vmatpush1.msra.mxu0 0.0
    %608 = vmatprep.subr.mxu0 0.0
    %609 = vmatpush1.msra.mxu0 0.0
    %610 = vmatprep.subr.mxu0 0.0
    %611 = vmatpush1.msra.mxu0 0.0
    %612 = vmatprep.subr.mxu0 0.0
    %613 = vmatpush1.msra.mxu0 0.0
    %614 = vmatprep.subr.mxu0 0.0
    %615 = vmatpush1.msra.mxu0 0.0
    %616 = vmatprep.subr.mxu0 0.0
    %617 = vmatpush1.msra.mxu0 0.0
    %618 = vmatprep.subr.mxu0 0.0
    %619 = vmatpush1.msra.mxu0 0.0
    %620 = vmatprep.subr.mxu0 0.0
    %621 = vmatpush1.msra.mxu0 0.0
    %622 = vmatprep.subr.mxu0 0.0
    %623 = vmatpush1.msra.mxu0 0.0
    %624 = vmatprep.subr.mxu0 0.0
    %625 = vmatpush1.msra.mxu0 0.0
    %626 = vmatprep.subr.mxu0 0.0
    %627 = vmatpush1.msra.mxu0 0.0
    %628 = vmatprep.subr.mxu0 0.0
    %629 = vmatpush1.msra.mxu0 0.0
    %630 = vmatprep.subr.mxu0 0.0
    %631 = vmatpush1.msra.mxu0 0.0
    %632 = vmatprep.subr.mxu0 0.0
    %633 = vmatpush1.msra.mxu0 0.0
    %634 = vmatprep.subr.mxu0 0.0
    %635 = vmatpush1.msra.mxu0 0.0
    %636 = vmatprep.subr.mxu0 0.0
    %637 = vmatpush1.msra.mxu0 0.0
    %638 = vmatprep.subr.mxu0 0.0
    %639 = vmatpush1.msra.mxu0 0.0
    %640 = vmatprep.subr.mxu0 0.0
    %641 = vmatpush1.msra.mxu0 0.0
    %642 = vmatprep.subr.mxu0 0.0
    %643 = vmatpush1.msra.mxu0 0.0
    %644 = vmatprep.subr.mxu0 0.0
    %645 = vmatpush1.msra.mxu0 0.0
    %646 = vmatprep.subr.mxu0 0.0
    %647 = vmatpush1.msra.mxu0 0.0
    %648 = vmatprep.subr.mxu0 0.0
    %649 = vmatpush1.msra.mxu0 0.0
    %650 = vmatprep.subr.mxu0 0.0
    %651 = vmatpush1.msra.mxu0 0.0
    %652 = vmatprep.subr.mxu0 0.0
    %653 = vmatpush1.msra.mxu0 0.0
    %654 = vmatprep.subr.mxu0 0.0
    %655 = vmatpush1.msra.mxu0 0.0
    %656 = vmatprep.subr.mxu0 0.0
    %657 = vmatpush1.msra.mxu0 0.0
    %658 = vmatprep.subr.mxu0 0.0
    %659 = vmatpush1.msra.mxu0 0.0
    %660 = vmatprep.mubr.f32.mxu0 0.0
    %661 = vmatmul.mubr.f32.gmra.mrb[0].mxu0 %v239
    %v662 = vpop.f32.mrb[0].mxu0
    %v663 = vadd.f32 %v180, %v662
    %v664 = vpop.f32.mrb[0].mxu0
    %v665 = vadd.f32 %v184, %v664
    %666 = vdwg.mxu0
    %667 = vmatprep.subr.mxu0 %v64
    %668 = vmatpush1.msra.mxu0 %v63
    %669 = vmatprep.subr.mxu0 %v84
    %670 = vmatpush1.msra.mxu0 %v83
    %671 = vmatprep.subr.mxu0 %v104
    %672 = vmatpush1.msra.mxu0 %v103
    %673 = vmatprep.subr.mxu0 %v124
    %674 = vmatpush1.msra.mxu0 %v123
    %675 = vmatprep.subr.mxu0 0.0
    %676 = vmatpush1.msra.mxu0 0.0
    %677 = vmatprep.subr.mxu0 0.0
    %678 = vmatpush1.msra.mxu0 0.0
    %679 = vmatprep.subr.mxu0 0.0
    %680 = vmatpush1.msra.mxu0 0.0
    %681 = vmatprep.subr.mxu0 0.0
    %682 = vmatpush1.msra.mxu0 0.0
    %683 = vmatprep.subr.mxu0 0.0
    %684 = vmatpush1.msra.mxu0 0.0
    %685 = vmatprep.subr.mxu0 0.0
    %686 = vmatpush1.msra.mxu0 0.0
    %687 = vmatprep.subr.mxu0 0.0
    %688 = vmatpush1.msra.mxu0 0.0
    %689 = vmatprep.subr.mxu0 0.0
    %690 = vmatpush1.msra.mxu0 0.0
    %691 = vmatprep.subr.mxu0 0.0
    %692 = vmatpush1.msra.mxu0 0.0
    %693 = vmatprep.subr.mxu0 0.0
    %694 = vmatpush1.msra.mxu0 0.0
    %695 = vmatprep.subr.mxu0 0.0
    %696 = vmatpush1.msra.mxu0 0.0
    %697 = vmatprep.subr.mxu0 0.0
    %698 = vmatpush1.msra.mxu0 0.0
    %699 = vmatprep.subr.mxu0 0.0
    %700 = vmatpush1.msra.mxu0 0.0
    %701 = vmatprep.subr.mxu0 0.0
    %702 = vmatpush1.msra.mxu0 0.0
    %703 = vmatprep.subr.mxu0 0.0
    %704 = vmatpush1.msra.mxu0 0.0
    %705 = vmatprep.subr.mxu0 0.0
    %706 = vmatpush1.msra.mxu0 0.0
    %707 = vmatprep.subr.mxu0 0.0
    %708 = vmatpush1.msra.mxu0 0.0
    %709 = vmatprep.subr.mxu0 0.0
    %710 = vmatpush1.msra.mxu0 0.0
    %711 = vmatprep.subr.mxu0 0.0
    %712 = vmatpush1.msra.mxu0 0.0
    %713 = vmatprep.subr.mxu0 0.0
    %714 = vmatpush1.msra.mxu0 0.0
    %715 = vmatprep.subr.mxu0 0.0
    %716 = vmatpush1.msra.mxu0 0.0
    %717 = vmatprep.subr.mxu0 0.0
    %718 = vmatpush1.msra.mxu0 0.0
    %719 = vmatprep.subr.mxu0 0.0
    %720 = vmatpush1.msra.mxu0 0.0
    %721 = vmatprep.subr.mxu0 0.0
    %722 = vmatpush1.msra.mxu0 0.0
    %723 = vmatprep.subr.mxu0 0.0
    %724 = vmatpush1.msra.mxu0 0.0
    %725 = vmatprep.subr.mxu0 0.0
    %726 = vmatpush1.msra.mxu0 0.0
    %727 = vmatprep.subr.mxu0 0.0
    %728 = vmatpush1.msra.mxu0 0.0
    %729 = vmatprep.subr.mxu0 0.0
    %730 = vmatpush1.msra.mxu0 0.0
    %731 = vmatprep.mubr.f32.mxu0 0.0
    %732 = vmatmul.mubr.f32.gmra.mrb[0].mxu0 %v239
    %v733 = vpop.f32.mrb[0].mxu0
    %v734 = vadd.f32 %v188, %v733
    %v735 = vpop.f32.mrb[0].mxu0
    %v736 = vadd.f32 %v192, %v735
    %737 = vdwg.mxu0
    %738 = vmatprep.subr.mxu0 %v66
    %739 = vmatpush1.msra.mxu0 %v65
    %740 = vmatprep.subr.mxu0 %v86
    %741 = vmatpush1.msra.mxu0 %v85
    %742 = vmatprep.subr.mxu0 %v106
    %743 = vmatpush1.msra.mxu0 %v105
    %744 = vmatprep.subr.mxu0 %v126
    %745 = vmatpush1.msra.mxu0 %v125
    %746 = vmatprep.subr.mxu0 0.0
    %747 = vmatpush1.msra.mxu0 0.0
    %748 = vmatprep.subr.mxu0 0.0
    %749 = vmatpush1.msra.mxu0 0.0
    %750 = vmatprep.subr.mxu0 0.0
    %751 = vmatpush1.msra.mxu0 0.0
    %752 = vmatprep.subr.mxu0 0.0
    %753 = vmatpush1.msra.mxu0 0.0
    %754 = vmatprep.subr.mxu0 0.0
    %755 = vmatpush1.msra.mxu0 0.0
    %756 = vmatprep.subr.mxu0 0.0
    %757 = vmatpush1.msra.mxu0 0.0
    %758 = vmatprep.subr.mxu0 0.0
    %759 = vmatpush1.msra.mxu0 0.0
    %760 = vmatprep.subr.mxu0 0.0
    %761 = vmatpush1.msra.mxu0 0.0
    %762 = vmatprep.subr.mxu0 0.0
    %763 = vmatpush1.msra.mxu0 0.0
    %764 = vmatprep.subr.mxu0 0.0
    %765 = vmatpush1.msra.mxu0 0.0
    %766 = vmatprep.subr.mxu0 0.0
    %767 = vmatpush1.msra.mxu0 0.0
    %768 = vmatprep.subr.mxu0 0.0
    %769 = vmatpush1.msra.mxu0 0.0
    %770 = vmatprep.subr.mxu0 0.0
    %771 = vmatpush1.msra.mxu0 0.0
    %772 = vmatprep.subr.mxu0 0.0
    %773 = vmatpush1.msra.mxu0 0.0
    %774 = vmatprep.subr.mxu0 0.0
    %775 = vmatpush1.msra.mxu0 0.0
    %776 = vmatprep.subr.mxu0 0.0
    %777 = vmatpush1.msra.mxu0 0.0
    %778 = vmatprep.subr.mxu0 0.0
    %779 = vmatpush1.msra.mxu0 0.0
    %780 = vmatprep.subr.mxu0 0.0
    %781 = vmatpush1.msra.mxu0 0.0
    %782 = vmatprep.subr.mxu0 0.0
    %783 = vmatpush1.msra.mxu0 0.0
    %784 = vmatprep.subr.mxu0 0.0
    %785 = vmatpush1.msra.mxu0 0.0
    %786 = vmatprep.subr.mxu0 0.0
    %787 = vmatpush1.msra.mxu0 0.0
    %788 = vmatprep.subr.mxu0 0.0
    %789 = vmatpush1.msra.mxu0 0.0
    %790 = vmatprep.subr.mxu0 0.0
    %791 = vmatpush1.msra.mxu0 0.0
    %792 = vmatprep.subr.mxu0 0.0
    %793 = vmatpush1.msra.mxu0 0.0
    %794 = vmatprep.subr.mxu0 0.0
    %795 = vmatpush1.msra.mxu0 0.0
    %796 = vmatprep.subr.mxu0 0.0
    %797 = vmatpush1.msra.mxu0 0.0
    %798 = vmatprep.subr.mxu0 0.0
    %799 = vmatpush1.msra.mxu0 0.0
    %800 = vmatprep.subr.mxu0 0.0
    %801 = vmatpush1.msra.mxu0 0.0
    %802 = vmatprep.mubr.f32.mxu0 0.0
    %803 = vmatmul.mubr.f32.gmra.mrb[0].mxu0 %v239
    %v804 = vpop.f32.mrb[0].mxu0
    %v805 = vadd.f32 %v196, %v804
    %v806 = vpop.f32.mrb[0].mxu0
    %v807 = vadd.f32 %v200, %v806
    %808 = vdwg.mxu0
    %809 = vmatprep.subr.mxu0 %v68
    %810 = vmatpush1.msra.mxu0 %v67
    %811 = vmatprep.subr.mxu0 %v88
    %812 = vmatpush1.msra.mxu0 %v87
    %813 = vmatprep.subr.mxu0 %v108
    %814 = vmatpush1.msra.mxu0 %v107
    %815 = vmatprep.subr.mxu0 %v128
    %816 = vmatpush1.msra.mxu0 %v127
    %817 = vmatprep.subr.mxu0 0.0
    %818 = vmatpush1.msra.mxu0 0.0
    %819 = vmatprep.subr.mxu0 0.0
    %820 = vmatpush1.msra.mxu0 0.0
    %821 = vmatprep.subr.mxu0 0.0
    %822 = vmatpush1.msra.mxu0 0.0
    %823 = vmatprep.subr.mxu0 0.0
    %824 = vmatpush1.msra.mxu0 0.0
    %825 = vmatprep.subr.mxu0 0.0
    %826 = vmatpush1.msra.mxu0 0.0
    %827 = vmatprep.subr.mxu0 0.0
    %828 = vmatpush1.msra.mxu0 0.0
    %829 = vmatprep.subr.mxu0 0.0
    %830 = vmatpush1.msra.mxu0 0.0
    %831 = vmatprep.subr.mxu0 0.0
    %832 = vmatpush1.msra.mxu0 0.0
    %833 = vmatprep.subr.mxu0 0.0
    %834 = vmatpush1.msra.mxu0 0.0
    %835 = vmatprep.subr.mxu0 0.0
    %836 = vmatpush1.msra.mxu0 0.0
    %837 = vmatprep.subr.mxu0 0.0
    %838 = vmatpush1.msra.mxu0 0.0
    %839 = vmatprep.subr.mxu0 0.0
    %840 = vmatpush1.msra.mxu0 0.0
    %841 = vmatprep.subr.mxu0 0.0
    %842 = vmatpush1.msra.mxu0 0.0
    %843 = vmatprep.subr.mxu0 0.0
    %844 = vmatpush1.msra.mxu0 0.0
    %845 = vmatprep.subr.mxu0 0.0
    %846 = vmatpush1.msra.mxu0 0.0
    %847 = vmatprep.subr.mxu0 0.0
    %848 = vmatpush1.msra.mxu0 0.0
    %849 = vmatprep.subr.mxu0 0.0
    %850 = vmatpush1.msra.mxu0 0.0
    %851 = vmatprep.subr.mxu0 0.0
    %852 = vmatpush1.msra.mxu0 0.0
    %853 = vmatprep.subr.mxu0 0.0
    %854 = vmatpush1.msra.mxu0 0.0
    %855 = vmatprep.subr.mxu0 0.0
    %856 = vmatpush1.msra.mxu0 0.0
    %857 = vmatprep.subr.mxu0 0.0
    %858 = vmatpush1.msra.mxu0 0.0
    %859 = vmatprep.subr.mxu0 0.0
    %860 = vmatpush1.msra.mxu0 0.0
    %861 = vmatprep.subr.mxu0 0.0
    %862 = vmatpush1.msra.mxu0 0.0
    %863 = vmatprep.subr.mxu0 0.0
    %864 = vmatpush1.msra.mxu0 0.0
    %865 = vmatprep.subr.mxu0 0.0
    %866 = vmatpush1.msra.mxu0 0.0
    %867 = vmatprep.subr.mxu0 0.0
    %868 = vmatpush1.msra.mxu0 0.0
    %869 = vmatprep.subr.mxu0 0.0
    %870 = vmatpush1.msra.mxu0 0.0
    %871 = vmatprep.subr.mxu0 0.0
    %872 = vmatpush1.msra.mxu0 0.0
    %873 = vmatprep.mubr.f32.mxu0 0.0
    %874 = vmatmul.mubr.f32.gmra.mrb[0].mxu0 %v239
    %v875 = vpop.f32.mrb[0].mxu0
    %v876 = vadd.f32 %v204, %v875
    %v877 = vpop.f32.mrb[0].mxu0
    %v878 = vadd.f32 %v208, %v877
    %879 = vdwg.mxu0
    %880 = vmatprep.subr.mxu0 %v70
    %881 = vmatpush1.msra.mxu0 %v69
    %882 = vmatprep.subr.mxu0 %v90
    %883 = vmatpush1.msra.mxu0 %v89
    %884 = vmatprep.subr.mxu0 %v110
    %885 = vmatpush1.msra.mxu0 %v109
    %886 = vmatprep.subr.mxu0 %v130
    %887 = vmatpush1.msra.mxu0 %v129
    %888 = vmatprep.subr.mxu0 0.0
    %889 = vmatpush1.msra.mxu0 0.0
    %890 = vmatprep.subr.mxu0 0.0
    %891 = vmatpush1.msra.mxu0 0.0
    %892 = vmatprep.subr.mxu0 0.0
    %893 = vmatpush1.msra.mxu0 0.0
    %894 = vmatprep.subr.mxu0 0.0
    %895 = vmatpush1.msra.mxu0 0.0
    %896 = vmatprep.subr.mxu0 0.0
    %897 = vmatpush1.msra.mxu0 0.0
    %898 = vmatprep.subr.mxu0 0.0
    %899 = vmatpush1.msra.mxu0 0.0
    %900 = vmatprep.subr.mxu0 0.0
    %901 = vmatpush1.msra.mxu0 0.0
    %902 = vmatprep.subr.mxu0 0.0
    %903 = vmatpush1.msra.mxu0 0.0
    %904 = vmatprep.subr.mxu0 0.0
    %905 = vmatpush1.msra.mxu0 0.0
    %906 = vmatprep.subr.mxu0 0.0
    %907 = vmatpush1.msra.mxu0 0.0
    %908 = vmatprep.subr.mxu0 0.0
    %909 = vmatpush1.msra.mxu0 0.0
    %910 = vmatprep.subr.mxu0 0.0
    %911 = vmatpush1.msra.mxu0 0.0
    %912 = vmatprep.subr.mxu0 0.0
    %913 = vmatpush1.msra.mxu0 0.0
    %914 = vmatprep.subr.mxu0 0.0
    %915 = vmatpush1.msra.mxu0 0.0
    %916 = vmatprep.subr.mxu0 0.0
    %917 = vmatpush1.msra.mxu0 0.0
    %918 = vmatprep.subr.mxu0 0.0
    %919 = vmatpush1.msra.mxu0 0.0
    %920 = vmatprep.subr.mxu0 0.0
    %921 = vmatpush1.msra.mxu0 0.0
    %922 = vmatprep.subr.mxu0 0.0
    %923 = vmatpush1.msra.mxu0 0.0
    %924 = vmatprep.subr.mxu0 0.0
    %925 = vmatpush1.msra.mxu0 0.0
    %926 = vmatprep.subr.mxu0 0.0
    %927 = vmatpush1.msra.mxu0 0.0
    %928 = vmatprep.subr.mxu0 0.0
    %929 = vmatpush1.msra.mxu0 0.0
    %930 = vmatprep.subr.mxu0 0.0
    %931 = vmatpush1.msra.mxu0 0.0
    %932 = vmatprep.subr.mxu0 0.0
    %933 = vmatpush1.msra.mxu0 0.0
    %934 = vmatprep.subr.mxu0 0.0
    %935 = vmatpush1.msra.mxu0 0.0
    %936 = vmatprep.subr.mxu0 0.0
    %937 = vmatpush1.msra.mxu0 0.0
    %938 = vmatprep.subr.mxu0 0.0
    %939 = vmatpush1.msra.mxu0 0.0
    %940 = vmatprep.subr.mxu0 0.0
    %941 = vmatpush1.msra.mxu0 0.0
    %942 = vmatprep.subr.mxu0 0.0
    %943 = vmatpush1.msra.mxu0 0.0
    %944 = vmatprep.mubr.f32.mxu0 0.0
    %945 = vmatmul.mubr.f32.gmra.mrb[0].mxu0 %v239
    %v946 = vpop.f32.mrb[0].mxu0
    %v947 = vadd.f32 %v212, %v946
    %v948 = vpop.f32.mrb[0].mxu0
    %v949 = vadd.f32 %v216, %v948
    %950 = vdwg.mxu0
    %v951 = vmax.f32 %v308, 0.0
    %v952 = vmax.f32 %v310, 0.0
    %v953 = vmax.f32 %v379, 0.0
    %v954 = vmax.f32 %v381, 0.0
    %v955 = vmax.f32 %v450, 0.0
    %v956 = vmax.f32 %v452, 0.0
    %v957 = vmax.f32 %v521, 0.0
    %v958 = vmax.f32 %v523, 0.0
    %v959 = vmax.f32 %v592, 0.0
    %v960 = vmax.f32 %v594, 0.0
    %v961 = vmax.f32 %v663, 0.0
    %v962 = vmax.f32 %v665, 0.0
    %v963 = vmax.f32 %v734, 0.0
    %v964 = vmax.f32 %v736, 0.0
    %v965 = vmax.f32 %v805, 0.0
    %v966 = vmax.f32 %v807, 0.0
    %v967 = vmax.f32 %v876, 0.0
    %v968 = vmax.f32 %v878, 0.0
    %v969 = vmax.f32 %v947, 0.0
    %v970 = vmax.f32 %v949, 0.0
    %s971 = sld [smem:[#allocation2]]
    %s972 = sld [smem:[#allocation6]]
    %v973 = vstv %s972
    %v974 = vmul.f32 %v973, %v951
    %v975 = vmul.f32 %v973, %v952
    %v976 = vadd.f32 %v974, 0.0
    %v977 = vadd.f32 %v975, 0.0
    %s978 = sld [smem:[#allocation6 + $0x1]]
    %v979 = vstv %s978
    %v980 = vmul.f32 %v979, %v951
    %v981 = vmul.f32 %v979, %v952
    %v982 = vadd.f32 %v980, 0.0
    %v983 = vadd.f32 %v981, 0.0
    %s984 = sld [smem:[#allocation6 + $0x2]]
    %v985 = vstv %s984
    %v986 = vmul.f32 %v985, %v951
    %v987 = vmul.f32 %v985, %v952
    %v988 = vadd.f32 %v986, 0.0
    %v989 = vadd.f32 %v987, 0.0
    %s990 = sld [smem:[#allocation6 + $0x3]]
    %v991 = vstv %s990
    %v992 = vmul.f32 %v991, %v951
    %v993 = vmul.f32 %v991, %v952
    %v994 = vadd.f32 %v992, 0.0
    %v995 = vadd.f32 %v993, 0.0
    %s996 = sld [smem:[#allocation6 + $0x80]]
    %v997 = vstv %s996
    %v998 = vmul.f32 %v997, %v953
    %v999 = vmul.f32 %v997, %v954
    %v1000 = vadd.f32 %v976, %v998
    %v1001 = vadd.f32 %v977, %v999
    %s1002 = sld [smem:[#allocation6 + $0x81]]
    %v1003 = vstv %s1002
    %v1004 = vmul.f32 %v1003, %v953
    %v1005 = vmul.f32 %v1003, %v954
    %v1006 = vadd.f32 %v982, %v1004
    %v1007 = vadd.f32 %v983, %v1005
    %s1008 = sld [smem:[#allocation6 + $0x82]]
    %v1009 = vstv %s1008
    %v1010 = vmul.f32 %v1009, %v953
    %v1011 = vmul.f32 %v1009, %v954
    %v1012 = vadd.f32 %v988, %v1010
    %v1013 = vadd.f32 %v989, %v1011
    %s1014 = sld [smem:[#allocation6 + $0x83]]
    %v1015 = vstv %s1014
    %v1016 = vmul.f32 %v1015, %v953
    %v1017 = vmul.f32 %v1015, %v954
    %v1018 = vadd.f32 %v994, %v1016
    %v1019 = vadd.f32 %v995, %v1017
    %s1020 = sld [smem:[#allocation6 + $0x100]]
    %v1021 = vstv %s1020
    %v1022 = vmul.f32 %v1021, %v955
    %v1023 = vmul.f32 %v1021, %v956
    %v1024 = vadd.f32 %v1000, %v1022
    %v1025 = vadd.f32 %v1001, %v1023
    %s1026 = sld [smem:[#allocation6 + $0x101]]
    %v1027 = vstv %s1026
    %v1028 = vmul.f32 %v1027, %v955
    %v1029 = vmul.f32 %v1027, %v956
    %v1030 = vadd.f32 %v1006, %v1028
    %v1031 = vadd.f32 %v1007, %v1029
    %s1032 = sld [smem:[#allocation6 + $0x102]]
    %v1033 = vstv %s1032
    %v1034 = vmul.f32 %v1033, %v955
    %v1035 = vmul.f32 %v1033, %v956
    %v1036 = vadd.f32 %v1012, %v1034
    %v1037 = vadd.f32 %v1013, %v1035
    %s1038 = sld [smem:[#allocation6 + $0x103]]
    %v1039 = vstv %s1038
    %v1040 = vmul.f32 %v1039, %v955
    %v1041 = vmul.f32 %v1039, %v956
    %v1042 = vadd.f32 %v1018, %v1040
    %v1043 = vadd.f32 %v1019, %v1041
    %s1044 = sld [smem:[#allocation6 + $0x180]]
    %v1045 = vstv %s1044
    %v1046 = vmul.f32 %v1045, %v957
    %v1047 = vmul.f32 %v1045, %v958
    %v1048 = vadd.f32 %v1024, %v1046
    %v1049 = vadd.f32 %v1025, %v1047
    %s1050 = sld [smem:[#allocation6 + $0x181]]
    %v1051 = vstv %s1050
    %v1052 = vmul.f32 %v1051, %v957
    %v1053 = vmul.f32 %v1051, %v958
    %v1054 = vadd.f32 %v1030, %v1052
    %v1055 = vadd.f32 %v1031, %v1053
    %s1056 = sld [smem:[#allocation6 + $0x182]]
    %v1057 = vstv %s1056
    %v1058 = vmul.f32 %v1057, %v957
    %v1059 = vmul.f32 %v1057, %v958
    %v1060 = vadd.f32 %v1036, %v1058
    %v1061 = vadd.f32 %v1037, %v1059
    %s1062 = sld [smem:[#allocation6 + $0x183]]
    %v1063 = vstv %s1062
    %v1064 = vmul.f32 %v1063, %v957
    %v1065 = vmul.f32 %v1063, %v958
    %v1066 = vadd.f32 %v1042, %v1064
    %v1067 = vadd.f32 %v1043, %v1065
    %s1068 = sld [smem:[#allocation6 + $0x200]]
    %v1069 = vstv %s1068
    %v1070 = vmul.f32 %v1069, %v959
    %v1071 = vmul.f32 %v1069, %v960
    %v1072 = vadd.f32 %v1048, %v1070
    %v1073 = vadd.f32 %v1049, %v1071
    %s1074 = sld [smem:[#allocation6 + $0x201]]
    %v1075 = vstv %s1074
    %v1076 = vmul.f32 %v1075, %v959
    %v1077 = vmul.f32 %v1075, %v960
    %v1078 = vadd.f32 %v1054, %v1076
    %v1079 = vadd.f32 %v1055, %v1077
    %s1080 = sld [smem:[#allocation6 + $0x202]]
    %v1081 = vstv %s1080
    %v1082 = vmul.f32 %v1081, %v959
    %v1083 = vmul.f32 %v1081, %v960
    %v1084 = vadd.f32 %v1060, %v1082
    %v1085 = vadd.f32 %v1061, %v1083
    %s1086 = sld [smem:[#allocation6 + $0x203]]
    %v1087 = vstv %s1086
    %v1088 = vmul.f32 %v1087, %v959
    %v1089 = vmul.f32 %v1087, %v960
    %v1090 = vadd.f32 %v1066, %v1088
    %v1091 = vadd.f32 %v1067, %v1089
    %s1092 = sld [smem:[#allocation6 + $0x280]]
    %v1093 = vstv %s1092
    %v1094 = vmul.f32 %v1093, %v961
    %v1095 = vmul.f32 %v1093, %v962
    %v1096 = vadd.f32 %v1072, %v1094
    %v1097 = vadd.f32 %v1073, %v1095
    %s1098 = sld [smem:[#allocation6 + $0x281]]
    %v1099 = vstv %s1098
    %v1100 = vmul.f32 %v1099, %v961
    %v1101 = vmul.f32 %v1099, %v962
    %v1102 = vadd.f32 %v1078, %v1100
    %v1103 = vadd.f32 %v1079, %v1101
    %s1104 = sld [smem:[#allocation6 + $0x282]]
    %v1105 = vstv %s1104
    %v1106 = vmul.f32 %v1105, %v961
    %v1107 = vmul.f32 %v1105, %v962
    %v1108 = vadd.f32 %v1084, %v1106
    %v1109 = vadd.f32 %v1085, %v1107
    %s1110 = sld [smem:[#allocation6 + $0x283]]
    %v1111 = vstv %s1110
    %v1112 = vmul.f32 %v1111, %v961
    %v1113 = vmul.f32 %v1111, %v962
    %v1114 = vadd.f32 %v1090, %v1112
    %v1115 = vadd.f32 %v1091, %v1113
    %s1116 = sld [smem:[#allocation6 + $0x300]]
    %v1117 = vstv %s1116
    %v1118 = vmul.f32 %v1117, %v963
    %v1119 = vmul.f32 %v1117, %v964
    %v1120 = vadd.f32 %v1096, %v1118
    %v1121 = vadd.f32 %v1097, %v1119
    %s1122 = sld [smem:[#allocation6 + $0x301]]
    %v1123 = vstv %s1122
    %v1124 = vmul.f32 %v1123, %v963
    %v1125 = vmul.f32 %v1123, %v964
    %v1126 = vadd.f32 %v1102, %v1124
    %v1127 = vadd.f32 %v1103, %v1125
    %s1128 = sld [smem:[#allocation6 + $0x302]]
    %v1129 = vstv %s1128
    %v1130 = vmul.f32 %v1129, %v963
    %v1131 = vmul.f32 %v1129, %v964
    %v1132 = vadd.f32 %v1108, %v1130
    %v1133 = vadd.f32 %v1109, %v1131
    %s1134 = sld [smem:[#allocation6 + $0x303]]
    %v1135 = vstv %s1134
    %v1136 = vmul.f32 %v1135, %v963
    %v1137 = vmul.f32 %v1135, %v964
    %v1138 = vadd.f32 %v1114, %v1136
    %v1139 = vadd.f32 %v1115, %v1137
    %s1140 = sld [smem:[#allocation6 + $0x380]]
    %v1141 = vstv %s1140
    %v1142 = vmul.f32 %v1141, %v965
    %v1143 = vmul.f32 %v1141, %v966
    %v1144 = vadd.f32 %v1120, %v1142
    %v1145 = vadd.f32 %v1121, %v1143
    %s1146 = sld [smem:[#allocation6 + $0x381]]
    %v1147 = vstv %s1146
    %v1148 = vmul.f32 %v1147, %v965
    %v1149 = vmul.f32 %v1147, %v966
    %v1150 = vadd.f32 %v1126, %v1148
    %v1151 = vadd.f32 %v1127, %v1149
    %s1152 = sld [smem:[#allocation6 + $0x382]]
    %v1153 = vstv %s1152
    %v1154 = vmul.f32 %v1153, %v965
    %v1155 = vmul.f32 %v1153, %v966
    %v1156 = vadd.f32 %v1132, %v1154
    %v1157 = vadd.f32 %v1133, %v1155
    %s1158 = sld [smem:[#allocation6 + $0x383]]
    %v1159 = vstv %s1158
    %v1160 = vmul.f32 %v1159, %v965
    %v1161 = vmul.f32 %v1159, %v966
    %v1162 = vadd.f32 %v1138, %v1160
    %v1163 = vadd.f32 %v1139, %v1161
    %s1164 = sld [smem:[#allocation6 + $0x400]]
    %v1165 = vstv %s1164
    %v1166 = vmul.f32 %v1165, %v967
    %v1167 = vmul.f32 %v1165, %v968
    %v1168 = vadd.f32 %v1144, %v1166
    %v1169 = vadd.f32 %v1145, %v1167
    %s1170 = sld [smem:[#allocation6 + $0x401]]
    %v1171 = vstv %s1170
    %v1172 = vmul.f32 %v1171, %v967
    %v1173 = vmul.f32 %v1171, %v968
    %v1174 = vadd.f32 %v1150, %v1172
    %v1175 = vadd.f32 %v1151, %v1173
    %s1176 = sld [smem:[#allocation6 + $0x402]]
    %v1177 = vstv %s1176
    %v1178 = vmul.f32 %v1177, %v967
    %v1179 = vmul.f32 %v1177, %v968
    %v1180 = vadd.f32 %v1156, %v1178
    %v1181 = vadd.f32 %v1157, %v1179
    %s1182 = sld [smem:[#allocation6 + $0x403]]
    %v1183 = vstv %s1182
    %v1184 = vmul.f32 %v1183, %v967
    %v1185 = vmul.f32 %v1183, %v968
    %v1186 = vadd.f32 %v1162, %v1184
    %v1187 = vadd.f32 %v1163, %v1185
    %s1188 = sld [smem:[#allocation6 + $0x480]]
    %v1189 = vstv %s1188
    %v1190 = vmul.f32 %v1189, %v969
    %v1191 = vmul.f32 %v1189, %v970
    %v1192 = vadd.f32 %v1168, %v1190
    %v1193 = vadd.f32 %v1169, %v1191
    %s1194 = sld [smem:[#allocation6 + $0x481]]
    %v1195 = vstv %s1194
    %v1196 = vmul.f32 %v1195, %v969
    %v1197 = vmul.f32 %v1195, %v970
    %v1198 = vadd.f32 %v1174, %v1196
    %v1199 = vadd.f32 %v1175, %v1197
    %s1200 = sld [smem:[#allocation6 + $0x482]]
    %v1201 = vstv %s1200
    %v1202 = vmul.f32 %v1201, %v969
    %v1203 = vmul.f32 %v1201, %v970
    %v1204 = vadd.f32 %v1180, %v1202
    %v1205 = vadd.f32 %v1181, %v1203
    %s1206 = sld [smem:[#allocation6 + $0x483]]
    %v1207 = vstv %s1206
    %v1208 = vmul.f32 %v1207, %v969
    %v1209 = vmul.f32 %v1207, %v970
    %v1210 = vadd.f32 %v1186, %v1208
    %v1211 = vadd.f32 %v1187, %v1209
    %v1212 = vstv %s971
    %v1213 = vadd.f32 %v1192, %v1212
    %v1214 = vadd.f32 %v1193, %v1212
    %v1215 = vmax.f32 %v1213, 0.0
    %v1216 = vmax.f32 %v1214, 0.0
    %v1219 = vcombine.low %v1215, %v1216
    %v1221 = vunpack.c.l.s4 1983009808
    %v1222 = vunpack.c.0.s8 %v1221
    %v1223 = vlaneseq
    %v1224 = vshrl.u32 %v1223, 7
    %v1225 = vsub.s32 %v1222, %v1224
    %v1226 = vrot.slane %v1219, %v1225
    %1228 = vst [vmem:[%s5] sm:$0xf] %v1226
    %v1229 = vadd.f32 %v1198, %v1212
    %v1230 = vadd.f32 %v1199, %v1212
    %v1231 = vmax.f32 %v1229, 0.0
    %v1232 = vmax.f32 %v1230, 0.0
    %v1235 = vcombine.low %v1231, %v1232
    %v1237 = vunpack.c.l.s4 1983009808
    %v1238 = vunpack.c.0.s8 %v1237
    %v1239 = vlaneseq
    %v1240 = vshrl.u32 %v1239, 7
    %v1241 = vsub.s32 %v1238, %v1240
    %v1242 = vrot.slane %v1235, %v1241
    %1244 = vst [vmem:[%s5 + $0x4] sm:$0xf] %v1242
    %v1245 = vadd.f32 %v1204, %v1212
    %v1246 = vadd.f32 %v1205, %v1212
    %v1247 = vmax.f32 %v1245, 0.0
    %v1248 = vmax.f32 %v1246, 0.0
    %v1251 = vcombine.low %v1247, %v1248
    %v1253 = vunpack.c.l.s4 1983009808
    %v1254 = vunpack.c.0.s8 %v1253
    %v1255 = vlaneseq
    %v1256 = vshrl.u32 %v1255, 7
    %v1257 = vsub.s32 %v1254, %v1256
    %v1258 = vrot.slane %v1251, %v1257
    %1260 = vst [vmem:[%s5 + $0x8] sm:$0xf] %v1258
    %v1261 = vadd.f32 %v1210, %v1212
    %v1262 = vadd.f32 %v1211, %v1212
    %v1263 = vmax.f32 %v1261, 0.0
    %v1264 = vmax.f32 %v1262, 0.0
    %v1267 = vcombine.low %v1263, %v1264
    %v1269 = vunpack.c.l.s4 1983009808
    %v1270 = vunpack.c.0.s8 %v1269
    %v1271 = vlaneseq
    %v1272 = vshrl.u32 %v1271, 7
    %v1273 = vsub.s32 %v1270, %v1272
    %v1274 = vrot.slane %v1267, %v1273
    %1276 = vst [vmem:[%s5 + $0xc] sm:$0xf] %v1274
    // Predicated region
    $region30: #{generator_forward.1} parent=1 // pred_check
      _
    $region31: #{generator_forward.1} parent=1 // pred_check_branch
      %1278 = sbr.rel (0) target = $region33
    $region32: #{generator_forward.1} parent=1 // pred_region
      _
    $region33: #{generator_forward.1} parent=1 // pred_fallthru
      _
    // Predicated region
    $region34: #{generator_forward.1} parent=1 // pred_check
      _
    $region35: #{generator_forward.1} parent=1 // pred_check_branch
      %1280 = sbr.rel (0) target = $region37
    $region36: #{generator_forward.1} parent=1 // pred_region
      _
    $region37: #{generator_forward.1} parent=1 // pred_fallthru
      _
    %1281 = vsyncpa [#allocation4], 1
    %1282 = vsyncpa [#allocation5], 1

</llo_original>
